<compile_context>
chip_gen: v7x
topology: tpu7x:2x2x1
jax: 0.10.0
libtpu: 0.0.40
codegen_flags: <defaults>
</compile_context>

<pallas_src>
import functools

import jax
import jax.numpy as jnp
from jax import lax
from jax.experimental import pallas as pl
from jax.experimental.pallas import tpu as pltpu


def _conv_kernel(core_ref, halo_ref, w_ref, b_ref, o_ref, *,
                 kh_n, kw_n, toh, ow, stride, apply_relu):
    """One grid step = (batch image n, tile of `toh` output rows).

    core_ref: (S, P_W, Cin)        bf16  non-overlapping input row chunk
    halo_ref: (E, P_W, Cin)        bf16  first E rows of the next chunk
    w_ref:    (KH*KW*Cin, Cout)    bf16
    b_ref:    (1, Cout)            f32
    o_ref:    (toh, OW, Cout)      out dtype
    """
    cin = core_ref.shape[-1]
    m_t = toh * ow

    # Full input window for this tile (rows [0, S+E) of the padded image).
    win = jnp.concatenate([core_ref[...], halo_ref[...]], axis=0)     # bf16

    # Merged im2col slab (M_t, KH*KW*Cin), built once per tile: each tap is a
    # cheap shifted slice of the bf16 window (no f32 round trip), the lane
    # concat happens once, then a single MXU matmul with K = KH*KW*Cin and an
    # f32 result — no per-tap accumulator passes.
    # TODO(synk): for stride > 1, deinterleave the window into `stride` phases
    # once per tile instead of doing KH*KW strided slices.
    pieces = []
    for kh in range(kh_n):
        for kw in range(kw_n):
            xs = lax.slice(
                win,
                (kh, kw, 0),
                (kh + (toh - 1) * stride + 1, kw + (ow - 1) * stride + 1, cin),
                (stride, stride, 1))                      # (toh, ow, cin) bf16
            pieces.append(xs.reshape(m_t, cin))
    slab = jnp.concatenate(pieces, axis=-1)               # (M_t, KH*KW*Cin)

    acc = jnp.dot(slab, w_ref[...], preferred_element_type=jnp.float32)
    acc = acc + b_ref[...]
    if apply_relu:
        acc = jnp.maximum(acc, 0.0)
    o_ref[...] = acc.reshape(toh, ow, acc.shape[-1]).astype(o_ref.dtype)


def _vmem_capacity_bytes():
    """Physical VMEM per core; conservative fallback if the query fails."""
    try:
        info = pltpu.get_tpu_info()
        return int(getattr(info, "vmem_capacity_bytes", 64 * 1024 * 1024))
    except Exception:
        return 64 * 1024 * 1024


def _step_vmem_bytes(toh, ow, kh, kw, stride, cin, cout, in_it, out_it):
    """Rough per-grid-step VMEM working set for a given row-tile size."""
    s = toh * stride
    e = max(kh - stride, 1)
    p_w = (ow - 1) * stride + kw
    k_tot = kh * kw * cin
    m_t = toh * ow
    blocks = (2 * s * p_w * cin * in_it          # core chunk, double-buffered
              + 2 * e * p_w * cin * in_it        # halo chunk, double-buffered
              + k_tot * cout * in_it             # weights (single-buffered)
              + cout * 4                         # bias
              + 2 * m_t * cout * out_it)         # output block, double-buffered
    temps = ((s + e) * p_w * cin * in_it         # concatenated window
             + 2 * m_t * k_tot * in_it           # slab + tap slices
             + m_t * cout * 4)                   # f32 matmul result
    return blocks + temps


def conv2d_forward(x_nchw, weight, bias, *, stride=1, same_padding=False,
                   relu=True, rows_per_tile=None):
    """Forward pass of the PyTorch Conv2d wrapper module (bn=False path)."""
    N, Cin, H, W = x_nchw.shape
    Cout, Cin_w, KH, KW = weight.shape
    assert Cin == Cin_w, "channel mismatch"
    padding = (KH - 1) // 2 if same_padding else 0
    OH = (H + 2 * padding - KH) // stride + 1
    OW = (W + 2 * padding - KW) // stride + 1

    in_dt = jnp.bfloat16
    out_dt = x_nchw.dtype
    in_it = jnp.dtype(in_dt).itemsize
    out_it = jnp.dtype(out_dt).itemsize

    vmem_cap = _vmem_capacity_bytes()
    # Proxy for v7x-class parts (64 MiB VMEM per TC, 2 TensorCores per chip).
    two_tensorcores = vmem_cap <= 64 * 1024 * 1024

    # Tile size: large tiles to amortize the ~0.35us per-grid-step overhead
    # (target ~2048 output rows on 128 MiB-VMEM chips, ~1024 on v7x), shrunk
    # until the per-step working set fits a fraction of VMEM.
    if rows_per_tile is None:
        target_rows = 1024 if two_tensorcores else 2048
        toh = max(1, min(OH, pl.cdiv(target_rows, OW)))
        budget = int(0.35 * vmem_cap)
        while toh > 1 and _step_vmem_bytes(toh, OW, KH, KW, stride, Cin, Cout,
                                           in_it, out_it) > budget:
            toh = pl.cdiv(toh, 2)
        # Only v7x-class chips have 2 TensorCores: ensure both get work.
        if two_tensorcores and N * pl.cdiv(OH, toh) < 2 and OH > 1:
            toh = pl.cdiv(OH, 2)
    else:
        toh = rows_per_tile
    T = pl.cdiv(OH, toh)

    S = toh * stride                     # input rows per non-overlapping chunk
    E = max(KH - stride, 1)              # halo rows shared with the next chunk
    P_W = (OW - 1) * stride + KW         # input cols needed
    P_H = T * S + E                      # total padded input rows needed
    K_tot = KH * KW * Cin
    M_t = toh * OW

    # --- glue (all in bf16): cast first, NCHW -> NHWC, crop-then-pad.  The
    # crop guards the negative-pad case when stride does not evenly cover H/W.
    x = jnp.transpose(x_nchw.astype(in_dt), (0, 2, 3, 1))
    keep_h = min(H, P_H - padding)
    keep_w = min(W, P_W - padding)
    x = x[:, :keep_h, :keep_w, :]
    x = jnp.pad(x, ((0, 0),
                    (padding, P_H - padding - keep_h),
                    (padding, P_W - padding - keep_w),
                    (0, 0)))

    # Tiny per-tile halo: the first E rows of the next chunk (~E/toh of input).
    halos = jnp.stack(
        [lax.slice_in_dim(x, (t + 1) * S, (t + 1) * S + E, axis=1)
         for t in range(T)], axis=1)                     # (N, T, E, P_W, Cin)

    # Weights (Cout, Cin, KH, KW) -> (KH*KW*Cin, Cout); no Cout padding — the
    # output is stored at its true width.
    # TODO(synk): for very large weights (e.g. 3x3x1024x1024) add a Cout grid
    # axis so weights + buffers fit 64 MiB VMEM with headroom on v7x.
    w2d = jnp.transpose(weight, (2, 3, 1, 0)).reshape(K_tot, Cout).astype(in_dt)
    b2 = bias.astype(jnp.float32).reshape(1, Cout)

    kernel = functools.partial(_conv_kernel, kh_n=KH, kw_n=KW, toh=toh, ow=OW,
                               stride=stride, apply_relu=relu)

    cost = pl.CostEstimate(
        flops=2 * N * OH * OW * K_tot * Cout,
        transcendentals=0,
        bytes_accessed=(x.size * in_it + halos.size * in_it
                        + w2d.size * in_it + b2.size * 4
                        + N * T * M_t * Cout * out_it))

    est = _step_vmem_bytes(toh, OW, KH, KW, stride, Cin, Cout, in_it, out_it)
    vmem_limit = int(min(vmem_cap // 2, max(2 * est, 32 * 1024 * 1024)))

    out = pl.pallas_call(
        kernel,
        out_shape=jax.ShapeDtypeStruct((N, T * toh, OW, Cout), out_dt),
        grid_spec=pltpu.PrefetchScalarGridSpec(
            num_scalar_prefetch=0,
            grid=(N, T),
            in_specs=[
                # non-overlapping row chunk of the padded input (auto-pipelined)
                pl.BlockSpec((None, S, P_W, Cin), lambda n, t: (n, t, 0, 0)),
                # matching halo rows for this tile
                pl.BlockSpec((None, None, E, P_W, Cin),
                             lambda n, t: (n, t, 0, 0, 0)),
                # full weights / bias, constant index_map -> single-buffered
                pl.BlockSpec((K_tot, Cout), lambda n, t: (0, 0),
                             pipeline_mode=pl.Buffered(1)),
                pl.BlockSpec((1, Cout), lambda n, t: (0, 0),
                             pipeline_mode=pl.Buffered(1)),
            ],
            out_specs=pl.BlockSpec((None, toh, OW, Cout),
                                   lambda n, t: (n, t, 0, 0)),
        ),
        compiler_params=pltpu.CompilerParams(
            dimension_semantics=("parallel", "parallel"),
            vmem_limit_bytes=vmem_limit),
        cost_estimate=cost,
    )(x, halos, w2d, b2)

    # --- glue: crop the over-computed bottom rows, back to NCHW (module API).
    # TODO(synk): keep NHWC / fuse this transpose into the consumer when the
    # surrounding network is NHWC.
    out = out[:, :OH]
    return jnp.transpose(out, (0, 3, 1, 2))


if __name__ == "__main__":
    # Module config: Conv2d(in=4, out=8, kernel_size=3, stride=1,
    #                       relu=True, same_padding=True, bn=False)
    in_channels, out_channels, kernel_size, stride = 4, 8, 3, 1
    same_padding, relu = True, True

    key = jax.random.PRNGKey(0)
    kx, kw_, kb = jax.random.split(key, 3)
    x = jax.random.normal(kx, (2, in_channels, 16, 16), dtype=jnp.float32)
    weight = 0.1 * jax.random.normal(
        kw_, (out_channels, in_channels, kernel_size, kernel_size),
        dtype=jnp.float32)
    bias = 0.1 * jax.random.normal(kb, (out_channels,), dtype=jnp.float32)

    out = conv2d_forward(x, weight, bias, stride=stride,
                         same_padding=same_padding, relu=relu)
    out = jax.block_until_ready(out)

    # Reference: XLA conv on the same bf16-rounded operands (the kernel feeds
    # the MXU bf16 and accumulates in f32), PyTorch NCHW/OIHW semantics.
    pad = (kernel_size - 1) // 2 if same_padding else 0
    x_b = x.astype(jnp.bfloat16).astype(jnp.float32)
    w_b = weight.astype(jnp.bfloat16).astype(jnp.float32)
    ref = jax.lax.conv_general_dilated(
        x_b, w_b, (stride, stride), [(pad, pad), (pad, pad)],
        dimension_numbers=("NCHW", "OIHW", "NCHW"))
    ref = ref + bias[None, :, None, None]
    if relu:
        ref = jnp.maximum(ref, 0.0)
    assert out.shape == ref.shape, (out.shape, ref.shape)
    err = float(jnp.max(jnp.abs(out - ref)))
    assert jnp.allclose(out, ref, atol=5e-3, rtol=5e-3), err

    print("KERNEL_OK")
</pallas_src>

<mosaic_0001>
module attributes {stable_mosaic.version = 11 : i64} {
  func.func @_conv_kernel(%arg0: i32, %arg1: i32, %arg2: memref<1x16x18x4xbf16, #tpu.memory_space<vmem>>, %arg3: memref<1x1x2x18x4xbf16, #tpu.memory_space<vmem>>, %arg4: memref<36x8xbf16, #tpu.memory_space<vmem>>, %arg5: memref<1x8xf32, #tpu.memory_space<vmem>>, %arg6: memref<1x16x16x8xf32, #tpu.memory_space<vmem>>) attributes {dimension_semantics = [#tpu.dimension_semantics<parallel>, #tpu.dimension_semantics<parallel>], iteration_bounds = array<i64: 2, 1>, scalar_prefetch = 0 : i64, scratch_operands = 0 : i64, tpu.core_type = #tpu.core_type<tc>, window_params = [{transform_indices = @transform_0, window_bounds = array<i64: 1, 16, 18, 4>}, {transform_indices = @transform_1, window_bounds = array<i64: 1, 1, 2, 18, 4>}, {pipeline_mode = #tpu.pipeline_mode<synchronous>, transform_indices = @transform_2, window_bounds = array<i64: 36, 8>}, {pipeline_mode = #tpu.pipeline_mode<synchronous>, transform_indices = @transform_3, window_bounds = array<i64: 1, 8>}, {transform_indices = @transform_4, window_bounds = array<i64: 1, 16, 16, 8>}]} {
    %c0 = arith.constant 0 : index
    %c0_0 = arith.constant 0 : index
    %c0_1 = arith.constant 0 : index
    %c0_2 = arith.constant 0 : index
    %0 = vector.load %arg2[%c0, %c0_0, %c0_1, %c0_2] : memref<1x16x18x4xbf16, #tpu.memory_space<vmem>>, vector<1x16x18x4xbf16>
    %1 = vector.shape_cast %0 : vector<1x16x18x4xbf16> to vector<16x18x4xbf16>
    %c0_3 = arith.constant 0 : index
    %c0_4 = arith.constant 0 : index
    %c0_5 = arith.constant 0 : index
    %c0_6 = arith.constant 0 : index
    %c0_7 = arith.constant 0 : index
    %2 = vector.load %arg3[%c0_3, %c0_4, %c0_5, %c0_6, %c0_7] : memref<1x1x2x18x4xbf16, #tpu.memory_space<vmem>>, vector<1x1x2x18x4xbf16>
    %3 = vector.shape_cast %2 : vector<1x1x2x18x4xbf16> to vector<2x18x4xbf16>
    %4 = tpu.concatenate %1, %3 in 0 : vector<16x18x4xbf16>, vector<2x18x4xbf16> -> vector<18x18x4xbf16>
    %5 = vector.extract_strided_slice %4 {offsets = [0, 0, 0], sizes = [16, 16, 4], strides = [1, 1, 1]} : vector<18x18x4xbf16> to vector<16x16x4xbf16>
    %6 = vector.shape_cast %5 : vector<16x16x4xbf16> to vector<256x4xbf16>
    %7 = vector.extract_strided_slice %4 {offsets = [0, 1, 0], sizes = [16, 16, 4], strides = [1, 1, 1]} : vector<18x18x4xbf16> to vector<16x16x4xbf16>
    %8 = vector.shape_cast %7 : vector<16x16x4xbf16> to vector<256x4xbf16>
    %9 = vector.extract_strided_slice %4 {offsets = [0, 2, 0], sizes = [16, 16, 4], strides = [1, 1, 1]} : vector<18x18x4xbf16> to vector<16x16x4xbf16>
    %10 = vector.shape_cast %9 : vector<16x16x4xbf16> to vector<256x4xbf16>
    %11 = vector.extract_strided_slice %4 {offsets = [1, 0, 0], sizes = [16, 16, 4], strides = [1, 1, 1]} : vector<18x18x4xbf16> to vector<16x16x4xbf16>
    %12 = vector.shape_cast %11 : vector<16x16x4xbf16> to vector<256x4xbf16>
    %13 = vector.extract_strided_slice %4 {offsets = [1, 1, 0], sizes = [16, 16, 4], strides = [1, 1, 1]} : vector<18x18x4xbf16> to vector<16x16x4xbf16>
    %14 = vector.shape_cast %13 : vector<16x16x4xbf16> to vector<256x4xbf16>
    %15 = vector.extract_strided_slice %4 {offsets = [1, 2, 0], sizes = [16, 16, 4], strides = [1, 1, 1]} : vector<18x18x4xbf16> to vector<16x16x4xbf16>
    %16 = vector.shape_cast %15 : vector<16x16x4xbf16> to vector<256x4xbf16>
    %17 = vector.extract_strided_slice %4 {offsets = [2, 0, 0], sizes = [16, 16, 4], strides = [1, 1, 1]} : vector<18x18x4xbf16> to vector<16x16x4xbf16>
    %18 = vector.shape_cast %17 : vector<16x16x4xbf16> to vector<256x4xbf16>
    %19 = vector.extract_strided_slice %4 {offsets = [2, 1, 0], sizes = [16, 16, 4], strides = [1, 1, 1]} : vector<18x18x4xbf16> to vector<16x16x4xbf16>
    %20 = vector.shape_cast %19 : vector<16x16x4xbf16> to vector<256x4xbf16>
    %21 = vector.extract_strided_slice %4 {offsets = [2, 2, 0], sizes = [16, 16, 4], strides = [1, 1, 1]} : vector<18x18x4xbf16> to vector<16x16x4xbf16>
    %22 = vector.shape_cast %21 : vector<16x16x4xbf16> to vector<256x4xbf16>
    %23 = tpu.concatenate %6, %8, %10, %12, %14, %16, %18, %20, %22 in 1 : vector<256x4xbf16>, vector<256x4xbf16>, vector<256x4xbf16>, vector<256x4xbf16>, vector<256x4xbf16>, vector<256x4xbf16>, vector<256x4xbf16>, vector<256x4xbf16>, vector<256x4xbf16> -> vector<256x36xbf16>
    %c0_8 = arith.constant 0 : index
    %c0_9 = arith.constant 0 : index
    %24 = vector.load %arg4[%c0_8, %c0_9] : memref<36x8xbf16, #tpu.memory_space<vmem>>, vector<36x8xbf16>
    %cst = arith.constant dense<0.000000e+00> : vector<256x8xf32>
    %25 = tpu.matmul %23, %24, %cst {dimension_numbers = #tpu.dot_dimension_numbers<[1], [0], [0], [1], [0, 0, 1, 1], [], []>} : vector<256x36xbf16>, vector<36x8xbf16>, vector<256x8xf32> -> vector<256x8xf32>
    %c0_10 = arith.constant 0 : index
    %c0_11 = arith.constant 0 : index
    %26 = vector.load %arg5[%c0_10, %c0_11] : memref<1x8xf32, #tpu.memory_space<vmem>>, vector<1x8xf32>
    %27 = vector.broadcast %26 : vector<1x8xf32> to vector<256x8xf32>
    %28 = arith.addf %25, %27 : vector<256x8xf32>
    %cst_12 = arith.constant 0.000000e+00 : f32
    %29 = vector.broadcast %cst_12 : f32 to vector<256x8xf32>
    %30 = arith.maximumf %28, %29 : vector<256x8xf32>
    %31 = vector.shape_cast %30 : vector<256x8xf32> to vector<16x16x8xf32>
    %c0_13 = arith.constant 0 : index
    %c0_14 = arith.constant 0 : index
    %c0_15 = arith.constant 0 : index
    %c0_16 = arith.constant 0 : index
    %32 = vector.load %arg6[%c0_13, %c0_14, %c0_15, %c0_16] : memref<1x16x16x8xf32, #tpu.memory_space<vmem>>, vector<1x16x16x8xf32>
    %33 = vector.shape_cast %32 : vector<1x16x16x8xf32> to vector<16x16x8xf32>
    %34 = vector.shape_cast %31 : vector<16x16x8xf32> to vector<1x16x16x8xf32>
    tpu.vector_store %arg6[%c0_13, %c0_14, %c0_15, %c0_16], %34 {strides = array<i32>} : memref<1x16x16x8xf32, #tpu.memory_space<vmem>>, vector<1x16x16x8xf32>,
    return
  }
  func.func @transform_0(%arg0: i32, %arg1: i32) -> (i32, i32, i32, i32) {
    %c0_i32 = arith.constant 0 : i32
    %c0_i32_0 = arith.constant 0 : i32
    %c0_i32_1 = arith.constant 0 : i32
    return %arg0, %arg1, %c0_i32, %c0_i32_0 : i32, i32, i32, i32
  }
  func.func @transform_1(%arg0: i32, %arg1: i32) -> (i32, i32, i32, i32, i32) {
    %c0_i32 = arith.constant 0 : i32
    %c0_i32_0 = arith.constant 0 : i32
    %c0_i32_1 = arith.constant 0 : i32
    %c0_i32_2 = arith.constant 0 : i32
    return %arg0, %arg1, %c0_i32, %c0_i32_0, %c0_i32_1 : i32, i32, i32, i32, i32
  }
  func.func @transform_2(%arg0: i32, %arg1: i32) -> (i32, i32) {
    %c0_i32 = arith.constant 0 : i32
    %c0_i32_0 = arith.constant 0 : i32
    %c0_i32_1 = arith.constant 0 : i32
    return %c0_i32, %c0_i32_0 : i32, i32
  }
  func.func @transform_3(%arg0: i32, %arg1: i32) -> (i32, i32) {
    %c0_i32 = arith.constant 0 : i32
    %c0_i32_0 = arith.constant 0 : i32
    %c0_i32_1 = arith.constant 0 : i32
    return %c0_i32, %c0_i32_0 : i32, i32
  }
  func.func @transform_4(%arg0: i32, %arg1: i32) -> (i32, i32, i32, i32) {
    %c0_i32 = arith.constant 0 : i32
    %c0_i32_0 = arith.constant 0 : i32
    %c0_i32_1 = arith.constant 0 : i32
    return %arg0, %arg1, %c0_i32, %c0_i32_0 : i32, i32, i32, i32
  }
}

</mosaic_0001>

<llo_original>
// kernel: tpu_custom_call.1
$region0: #{tpu_custom_call.1}
  #allocation0 [shape = 'u32[]', space=smem, size = 0x4, offset = 0x4, fixed_abs, tag = 'smem constant byte address 0x4 - core index']
  #allocation1 [shape = 'u32[144,128]{1,0:T(1,128)}', space=vmem, size = 0x12000, scoped, tag = 'internal scratch']
  %s0 = inlined_call_operand.vmem [shape: bf16[2,18,18,4], index: 0, kind: input, shape index: {}]
  %s1 = inlined_call_operand.vmem [shape: bf16[2,1,2,18,4], index: 1, kind: input, shape index: {}]
  %s2 = inlined_call_operand.vmem [shape: bf16[36,8], index: 2, kind: input, shape index: {}]
  %s3 = inlined_call_operand.vmem [shape: f32[1,8], index: 3, kind: input, shape index: {}]
  %s4 = inlined_call_operand.vmem [shape: f32[2,16,16,8], index: 4, kind: output, shape index: {}]
  %s5 = sld [smem:[#allocation0]]
  $region49: #{tpu_custom_call.1} parent=0
    _
  %s7 = ssub.s32 1, %s5
  %s8 = scalar_select 0, %s7, %s5
  loop: start=0, step=1, limit=4
  $region2: #{tpu_custom_call.1} parent=0 // loop_pre_header
    _
  $region3: #{tpu_custom_call.1} parent=0 // loop_header
    %s10 = sphi 0, %s14
    %p11 = scmp.ge.s32.totalorder %s10, 4
    %s17 = sphi 0, %s29
    %s18 = sphi 0, %s25
    %s19 = sphi 0, %s17
    %s20 = sphi 0, %s18
    %s21 = sphi 0, %s19
    %s22 = sphi 0, %s20
    %s34 = sphi 0, %s36
    %s37 = sphi 0, %s34
    %s38 = sphi 0, %s37
    %s54 = sphi 0, %s38
    %s62 = sphi 0, %s64
    %s65 = sphi 0, %s62
    %s66 = sphi 0, %s65
    %s82 = sphi 0, %s66
    %s86 = sphi 0, %s86
    %s88 = sphi 0, %s86
    %s89 = sphi 0, %s88
    %s103 = sphi 0, %s89
    %s107 = sphi 0, %s107
    %s109 = sphi 0, %s107
    %s110 = sphi 0, %s109
    %s124 = sphi 0, %s110
    %s132 = sphi 0, %s134
    %s135 = sphi 0, %s132
    %s136 = sphi 0, %s135
    %s152 = sphi 0, %s136
  $region4: #{tpu_custom_call.1} parent=0 // loop_header_branch
    %13 = sbr.rel (%p11) target = $region8
  $region5: #{tpu_custom_call.1} parent=0 // loop_body
    %s15 = ssub.s32 %s10, 1
    %s16 = ssub.s32 %s10, 2
    %s23 = sadd.s32 1, %s18
    %p24 = scmp.ge.s32.totalorder %s23, 1
    %s25 = scalar_select %p24, 0, %s23
    %s26 = sadd.s32 1, %s17
    %s27 = scalar_select %p24, %s26, %s17
    %p28 = scmp.ge.s32.totalorder %s27, 2
    %s29 = scalar_select %p28, 0, %s27
    %s30 = ssub.s32 %s17, %s29
    %s31 = ssub.s32 %s18, %s25
    %s32 = sor.u32 %s30, %s31
    %p33 = scmp.eq.s32.totalorder %s32, 0
    %s35 = sadd.s32 %s34, 1
    %s36 = scalar_select %p33, %s34, %s35
    %p39 = pneg %p33
    %p40 = scmp.eq.s32.totalorder %s10, 1
    %p41 = por %p39, %p40
    %p42 = scmp.ne.s32.totalorder %s34, %s37
    %p43 = scmp.eq.s32.totalorder %s10, 0
    %p44 = por %p42, %p43
    %p45 = scmp.ne.s32.totalorder %s34, %s37
    %p46 = scmp.eq.s32.totalorder %s15, 1
    %p47 = por %p45, %p46
    %p48 = scmp.ne.s32.totalorder %s37, %s38
    %p49 = scmp.eq.s32.totalorder %s15, 0
    %p50 = por %p48, %p49
    %p51 = scmp.ne.s32.totalorder %s37, %s38
    %p52 = scmp.eq.s32.totalorder %s16, 1
    %p53 = por %p51, %p52
    %p55 = scmp.ne.s32.totalorder %s38, %s54
    %p56 = scmp.eq.s32.totalorder %s16, 0
    %p57 = por %p55, %p56
    %s58 = ssub.s32 %s17, %s29
    %s59 = ssub.s32 %s18, %s25
    %s60 = sor.u32 %s58, %s59
    %p61 = scmp.eq.s32.totalorder %s60, 0
    %s63 = sadd.s32 %s62, 1
    %s64 = scalar_select %p61, %s62, %s63
    %p67 = pneg %p61
    %p68 = scmp.eq.s32.totalorder %s10, 1
    %p69 = por %p67, %p68
    %p70 = scmp.ne.s32.totalorder %s62, %s65
    %p71 = scmp.eq.s32.totalorder %s10, 0
    %p72 = por %p70, %p71
    %p73 = scmp.ne.s32.totalorder %s62, %s65
    %p74 = scmp.eq.s32.totalorder %s15, 1
    %p75 = por %p73, %p74
    %p76 = scmp.ne.s32.totalorder %s65, %s66
    %p77 = scmp.eq.s32.totalorder %s15, 0
    %p78 = por %p76, %p77
    %p79 = scmp.ne.s32.totalorder %s65, %s66
    %p80 = scmp.eq.s32.totalorder %s16, 1
    %p81 = por %p79, %p80
    %p83 = scmp.ne.s32.totalorder %s66, %s82
    %p84 = scmp.eq.s32.totalorder %s16, 0
    %p85 = por %p83, %p84
    %s87 = sadd.s32 %s86, 1
    %p90 = scmp.eq.s32.totalorder %s10, 1
    %p91 = scmp.ne.s32.totalorder %s86, %s88
    %p92 = scmp.eq.s32.totalorder %s10, 0
    %p93 = por %p91, %p92
    %p94 = scmp.ne.s32.totalorder %s86, %s88
    %p95 = scmp.eq.s32.totalorder %s15, 1
    %p96 = por %p94, %p95
    %p97 = scmp.ne.s32.totalorder %s88, %s89
    %p98 = scmp.eq.s32.totalorder %s15, 0
    %p99 = por %p97, %p98
    %p100 = scmp.ne.s32.totalorder %s88, %s89
    %p101 = scmp.eq.s32.totalorder %s16, 1
    %p102 = por %p100, %p101
    %p104 = scmp.ne.s32.totalorder %s89, %s103
    %p105 = scmp.eq.s32.totalorder %s16, 0
    %p106 = por %p104, %p105
    %s108 = sadd.s32 %s107, 1
    %p111 = scmp.eq.s32.totalorder %s10, 1
    %p112 = scmp.ne.s32.totalorder %s107, %s109
    %p113 = scmp.eq.s32.totalorder %s10, 0
    %p114 = por %p112, %p113
    %p115 = scmp.ne.s32.totalorder %s107, %s109
    %p116 = scmp.eq.s32.totalorder %s15, 1
    %p117 = por %p115, %p116
    %p118 = scmp.ne.s32.totalorder %s109, %s110
    %p119 = scmp.eq.s32.totalorder %s15, 0
    %p120 = por %p118, %p119
    %p121 = scmp.ne.s32.totalorder %s109, %s110
    %p122 = scmp.eq.s32.totalorder %s16, 1
    %p123 = por %p121, %p122
    %p125 = scmp.ne.s32.totalorder %s110, %s124
    %p126 = scmp.eq.s32.totalorder %s16, 0
    %p127 = por %p125, %p126
    %s128 = ssub.s32 %s17, %s29
    %s129 = ssub.s32 %s18, %s25
    %s130 = sor.u32 %s128, %s129
    %p131 = scmp.eq.s32.totalorder %s130, 0
    %s133 = sadd.s32 %s132, 1
    %s134 = scalar_select %p131, %s132, %s133
    %p137 = pneg %p131
    %p138 = scmp.eq.s32.totalorder %s10, 1
    %p139 = por %p137, %p138
    %p140 = scmp.ne.s32.totalorder %s132, %s135
    %p141 = scmp.eq.s32.totalorder %s10, 0
    %p142 = por %p140, %p141
    %p143 = scmp.ne.s32.totalorder %s132, %s135
    %p144 = scmp.eq.s32.totalorder %s15, 1
    %p145 = por %p143, %p144
    %p146 = scmp.ne.s32.totalorder %s135, %s136
    %p147 = scmp.eq.s32.totalorder %s15, 0
    %p148 = por %p146, %p147
    %p149 = scmp.ne.s32.totalorder %s135, %s136
    %p150 = scmp.eq.s32.totalorder %s16, 1
    %p151 = por %p149, %p150
    %p153 = scmp.ne.s32.totalorder %s136, %s152
    %p154 = scmp.eq.s32.totalorder %s16, 0
    %p155 = por %p153, %p154
    %p156 = scmp.le.s32.totalorder 1, %s10
    %p157 = scmp.lt.s32.totalorder %s10, 3
    %p158 = pnand %p156, %p157
    %p159 = pneg %p158
    // Predicated region
    $region9: #{tpu_custom_call.1} parent=5 // pred_check
      _
    $region10: #{tpu_custom_call.1} parent=5 // pred_check_branch
      %161 = sbr.rel (%p158) target = $region12
    $region11: #{tpu_custom_call.1} parent=5 // pred_region
      %s162 = ssub.s32 %s10, 1
      // Predicated region
      $region13: #{tpu_custom_call.1} parent=11 // pred_check
        %p163 = pneg %p99
      $region14: #{tpu_custom_call.1} parent=11 // pred_check_branch
        %165 = sbr.rel (%p163) target = $region16
      $region15: #{tpu_custom_call.1} parent=11 // pred_region
        _
      $region16: #{tpu_custom_call.1} parent=11 // pred_fallthru
        _
      // Predicated region
      $region17: #{tpu_custom_call.1} parent=11 // pred_check
        %p166 = pneg %p120
      $region18: #{tpu_custom_call.1} parent=11 // pred_check_branch
        %168 = sbr.rel (%p166) target = $region20
      $region19: #{tpu_custom_call.1} parent=11 // pred_region
        _
      $region20: #{tpu_custom_call.1} parent=11 // pred_fallthru
        _
    $region12: #{tpu_custom_call.1} parent=5 // pred_fallthru
      _
    %p169 = scmp.lt.s32.totalorder %s10, 2
    // Predicated region
    $region21: #{tpu_custom_call.1} parent=5 // pred_check
      %p170 = pneg %p169
    $region22: #{tpu_custom_call.1} parent=5 // pred_check_branch
      %172 = sbr.rel (%p170) target = $region24
    $region23: #{tpu_custom_call.1} parent=5 // pred_region
      // Predicated region
      $region25: #{tpu_custom_call.1} parent=23 // pred_check
        %p173 = pneg %p44
      $region26: #{tpu_custom_call.1} parent=23 // pred_check_branch
        %175 = sbr.rel (%p173) target = $region28
      $region27: #{tpu_custom_call.1} parent=23 // pred_region
        %s176 = smul.u32 16, %s18
        %s177 = ssub.s32 18, %s176
        %p178 = scmp.lt.s32.totalorder %s177, 16
        %s179 = scalar_select %p178, %s177, 16
        %s180 = smul.u32 64, %s179
        %s181 = smul.u32 %s180, 3
        %p182 = scmp.lt.s32.totalorder %s17, 1
        %s183 = scalar_select %p182, %s17, 1
        %p184 = scmp.lt.s32.totalorder %s176, 17
        %s185 = scalar_select %p184, %s176, 17
        %s186 = smul.addr %s185, 3
        %s187 = smul.addr %s183, 54
        %s188 = sadd.s32 %s186, %s187
        %s189 = smul.addr %s188, 4
        %s190 = scalar_lea.vmem %s0, %s189
        %s191 = smul.u32 16, %s18
        %s192 = ssub.s32 18, %s191
        %p193 = scmp.lt.s32.totalorder %s192, 16
        %s194 = scalar_select %p193, %s192, 16
        %s195 = smul.u32 64, %s194
        %s196 = smul.u32 %s195, 3
      $region28: #{tpu_custom_call.1} parent=23 // pred_fallthru
        _
      // Predicated region
      $region29: #{tpu_custom_call.1} parent=23 // pred_check
        %p197 = pneg %p72
      $region30: #{tpu_custom_call.1} parent=23 // pred_check_branch
        %199 = sbr.rel (%p197) target = $region32
      $region31: #{tpu_custom_call.1} parent=23 // pred_region
        %p200 = scmp.lt.s32.totalorder %s17, 1
        %s201 = scalar_select %p200, %s17, 1
        %p202 = scmp.lt.s32.totalorder %s18, 0
        %s203 = scalar_select %p202, %s18, 0
        %s204 = smul.addr %s203, 6
        %s205 = smul.addr %s201, 6
        %s206 = sadd.s32 %s204, %s205
        %s207 = smul.addr %s206, 4
        %s208 = scalar_lea.vmem %s1, %s207
      $region32: #{tpu_custom_call.1} parent=23 // pred_fallthru
        _
    $region24: #{tpu_custom_call.1} parent=5 // pred_fallthru
      _
    %p209 = scmp.le.s32.totalorder 1, %s10
    %p210 = scmp.lt.s32.totalorder %s10, 3
    %p211 = pnand %p209, %p210
    %p212 = pneg %p211
    // Predicated region
    $region33: #{tpu_custom_call.1} parent=5 // pred_check
      _
    $region34: #{tpu_custom_call.1} parent=5 // pred_check_branch
      %214 = sbr.rel (%p211) target = $region36
    $region35: #{tpu_custom_call.1} parent=5 // pred_region
      %s215 = ssub.s32 %s10, 1
      %s216 = smul.u32 16, %s20
      %s217 = ssub.s32 18, %s216
      %p218 = scmp.lt.s32.totalorder %s217, 16
      %s219 = scalar_select %p218, %s217, 16
      %s220 = smul.u32 64, %s219
      %s221 = smul.u32 %s220, 3
      %p222 = scmp.lt.s32.totalorder %s19, 1
      %s223 = scalar_select %p222, %s19, 1
      %p224 = scmp.lt.s32.totalorder %s216, 17
      %s225 = scalar_select %p224, %s216, 17
      %s226 = smul.addr %s225, 3
      %s227 = smul.addr %s223, 54
      %s228 = sadd.s32 %s226, %s227
      %s229 = smul.addr %s228, 4
      %s230 = scalar_lea.vmem %s0, %s229
      %p231 = pneg %p50
      %p232 = pneg %p47
      %p233 = scmp.lt.s32.totalorder %s19, 1
      %s234 = scalar_select %p233, %s19, 1
      %p235 = scmp.lt.s32.totalorder %s20, 0
      %s236 = scalar_select %p235, %s20, 0
      %s237 = smul.addr %s236, 6
      %s238 = smul.addr %s234, 6
      %s239 = sadd.s32 %s237, %s238
      %s240 = smul.addr %s239, 4
      %s241 = scalar_lea.vmem %s1, %s240
      %p242 = pneg %p78
      %p243 = pneg %p75
      %p244 = pneg %p99
      %p245 = pneg %p96
      %p246 = pneg %p120
      %p247 = pneg %p117
      %p248 = pneg %p148
      %p249 = pneg %p145
      %s250 = smul.u32 16, %s20
      %p251 = scmp.lt.s32.totalorder %s19, 1
      %s252 = scalar_select %p251, %s19, 1
      %p253 = scmp.lt.s32.totalorder %s250, 15
      %s254 = scalar_select %p253, %s250, 15
      %s255 = smul.addr %s254, 2
      %s256 = smul.addr %s252, 32
      %s257 = sadd.s32 %s255, %s256
      %s258 = smul.addr %s257, 8
      %s259 = scalar_lea.vmem %s4, %s258
      %s260 = smul.u32 16, %s20
      %s261 = ssub.s32 18, %s260
      %p262 = scmp.lt.s32.totalorder %s261, 16
      %s263 = scalar_select %p262, %s261, 16
      %s264 = smul.u32 64, %s263
      %s265 = smul.u32 %s264, 3
      %p266 = scmp.lt.s32.totalorder %s19, 1
      %s267 = scalar_select %p266, %s19, 1
      %p268 = scmp.lt.s32.totalorder %s260, 17
      %s269 = scalar_select %p268, %s260, 17
      %s270 = smul.addr %s269, 3
      %s271 = smul.addr %s267, 54
      %s272 = sadd.s32 %s270, %s271
      %s273 = smul.addr %s272, 4
      %s274 = scalar_lea.vmem %s0, %s273
      %s275 = smul.u32 16, %s20
      %s276 = ssub.s32 18, %s275
      %p277 = scmp.lt.s32.totalorder %s276, 16
      %s278 = scalar_select %p277, %s276, 16
      %s279 = smul.u32 64, %s278
      %s280 = smul.u32 %s279, 3
      %p281 = scmp.lt.s32.totalorder %s19, 1
      %s282 = scalar_select %p281, %s19, 1
      %p283 = scmp.lt.s32.totalorder %s20, 0
      %s284 = scalar_select %p283, %s20, 0
      %s285 = smul.addr %s284, 6
      %s286 = smul.addr %s282, 6
      %s287 = sadd.s32 %s285, %s286
      %s288 = smul.addr %s287, 4
      %s289 = scalar_lea.vmem %s1, %s288
      %s290 = smul.u32 16, %s20
      %p291 = scmp.lt.s32.totalorder %s19, 1
      %s292 = scalar_select %p291, %s19, 1
      %p293 = scmp.lt.s32.totalorder %s290, 15
      %s294 = scalar_select %p293, %s290, 15
      %s295 = smul.addr %s294, 2
      %s296 = smul.addr %s292, 32
      %s297 = sadd.s32 %s295, %s296
      %s298 = smul.addr %s297, 8
      %s299 = scalar_lea.vmem %s4, %s298
      %s300 = smul.u32 16, %s20
      %v302 = vld [vmem:[%s274] sm:$0xf]
      %v303 = vld [vmem:[%s274 + $0x4] sm:$0xf]
      %v304 = vld [vmem:[%s274 + $0x8] sm:$0x1]
      %v305 = vld [vmem:[%s274 + $0xc] sm:$0xf]
      %v306 = vld [vmem:[%s274 + $0x10] sm:$0xf]
      %v307 = vld [vmem:[%s274 + $0x14] sm:$0x1]
      %v308 = vld [vmem:[%s274 + $0x18] sm:$0xf]
      %v309 = vld [vmem:[%s274 + $0x1c] sm:$0xf]
      %v310 = vld [vmem:[%s274 + $0x20] sm:$0x1]
      %v311 = vld [vmem:[%s274 + $0x24] sm:$0xf]
      %v312 = vld [vmem:[%s274 + $0x28] sm:$0xf]
      %v313 = vld [vmem:[%s274 + $0x2c] sm:$0x1]
      %v314 = vld [vmem:[%s274 + $0x30] sm:$0xf]
      %v315 = vld [vmem:[%s274 + $0x34] sm:$0xf]
      %v316 = vld [vmem:[%s274 + $0x38] sm:$0x1]
      %v317 = vld [vmem:[%s274 + $0x3c] sm:$0xf]
      %v318 = vld [vmem:[%s274 + $0x40] sm:$0xf]
      %v319 = vld [vmem:[%s274 + $0x44] sm:$0x1]
      %v320 = vld [vmem:[%s274 + $0x48] sm:$0xf]
      %v321 = vld [vmem:[%s274 + $0x4c] sm:$0xf]
      %v322 = vld [vmem:[%s274 + $0x50] sm:$0x1]
      %v323 = vld [vmem:[%s274 + $0x54] sm:$0xf]
      %v324 = vld [vmem:[%s274 + $0x58] sm:$0xf]
      %v325 = vld [vmem:[%s274 + $0x5c] sm:$0x1]
      %v326 = vld [vmem:[%s274 + $0x60] sm:$0xf]
      %v327 = vld [vmem:[%s274 + $0x64] sm:$0xf]
      %v328 = vld [vmem:[%s274 + $0x68] sm:$0x1]
      %v329 = vld [vmem:[%s274 + $0x6c] sm:$0xf]
      %v330 = vld [vmem:[%s274 + $0x70] sm:$0xf]
      %v331 = vld [vmem:[%s274 + $0x74] sm:$0x1]
      %v332 = vld [vmem:[%s274 + $0x78] sm:$0xf]
      %v333 = vld [vmem:[%s274 + $0x7c] sm:$0xf]
      %v334 = vld [vmem:[%s274 + $0x80] sm:$0x1]
      %v335 = vld [vmem:[%s274 + $0x84] sm:$0xf]
      %v336 = vld [vmem:[%s274 + $0x88] sm:$0xf]
      %v337 = vld [vmem:[%s274 + $0x8c] sm:$0x1]
      %v338 = vld [vmem:[%s274 + $0x90] sm:$0xf]
      %v339 = vld [vmem:[%s274 + $0x94] sm:$0xf]
      %v340 = vld [vmem:[%s274 + $0x98] sm:$0x1]
      %v341 = vld [vmem:[%s274 + $0x9c] sm:$0xf]
      %v342 = vld [vmem:[%s274 + $0xa0] sm:$0xf]
      %v343 = vld [vmem:[%s274 + $0xa4] sm:$0x1]
      %v344 = vld [vmem:[%s274 + $0xa8] sm:$0xf]
      %v345 = vld [vmem:[%s274 + $0xac] sm:$0xf]
      %v346 = vld [vmem:[%s274 + $0xb0] sm:$0x1]
      %v347 = vld [vmem:[%s274 + $0xb4] sm:$0xf]
      %v348 = vld [vmem:[%s274 + $0xb8] sm:$0xf]
      %v349 = vld [vmem:[%s274 + $0xbc] sm:$0x1]
      %v350 = vld [vmem:[%s289] sm:$0xf]
      %v351 = vld [vmem:[%s289 + $0x4] sm:$0xf]
      %v352 = vld [vmem:[%s289 + $0x8] sm:$0x1]
      %v353 = vld [vmem:[%s289 + $0xc] sm:$0xf]
      %v354 = vld [vmem:[%s289 + $0x10] sm:$0xf]
      %v355 = vld [vmem:[%s289 + $0x14] sm:$0x1]
      %vm356 = vsmask.f32 3328
      %vm357 = vsmask.f32 7440
      %vm358 = vmor %vm356, %vm357
      %v360 = vshrl.u32 %v302, 16
      %v362 = vrot.slane %v360, 4
      %v363 = vshll.u32 %v302, 16
      %v365 = vrot.slane %v363, 5
      %v366 = vor.u32 %v362, %v365
      %v367 = vrot.slane %v366, 4
      %v369 = vshll.u32 %v303, 16
      %v371 = vrot.slane %v369, 5
      %v372 = vsel %vm358, %v367, %v371
      %v373 = vshrl.u32 %v303, 16
      %v375 = vrot.slane %v373, 4
      %v376 = vor.u32 %v375, %v371
      %v377 = vrot.slane %v376, 4
      %v379 = vshll.u32 %v304, 16
      %v381 = vrot.slane %v379, 5
      %v382 = vsel %vm358, %v377, %v381
      %v384 = vshrl.u32 %v305, 16
      %v386 = vrot.slane %v384, 4
      %v387 = vshll.u32 %v305, 16
      %v389 = vrot.slane %v387, 5
      %v390 = vor.u32 %v386, %v389
      %v391 = vrot.slane %v390, 4
      %v393 = vshll.u32 %v306, 16
      %v395 = vrot.slane %v393, 5
      %v396 = vsel %vm358, %v391, %v395
      %v397 = vshrl.u32 %v306, 16
      %v399 = vrot.slane %v397, 4
      %v400 = vor.u32 %v399, %v395
      %v401 = vrot.slane %v400, 4
      %v403 = vshll.u32 %v307, 16
      %v405 = vrot.slane %v403, 5
      %v406 = vsel %vm358, %v401, %v405
      %v408 = vshrl.u32 %v308, 16
      %v410 = vrot.slane %v408, 4
      %v411 = vshll.u32 %v308, 16
      %v413 = vrot.slane %v411, 5
      %v414 = vor.u32 %v410, %v413
      %v415 = vrot.slane %v414, 4
      %v417 = vshll.u32 %v309, 16
      %v419 = vrot.slane %v417, 5
      %v420 = vsel %vm358, %v415, %v419
      %v421 = vshrl.u32 %v309, 16
      %v423 = vrot.slane %v421, 4
      %v424 = vor.u32 %v423, %v419
      %v425 = vrot.slane %v424, 4
      %v427 = vshll.u32 %v310, 16
      %v429 = vrot.slane %v427, 5
      %v430 = vsel %vm358, %v425, %v429
      %v432 = vshrl.u32 %v311, 16
      %v434 = vrot.slane %v432, 4
      %v435 = vshll.u32 %v311, 16
      %v437 = vrot.slane %v435, 5
      %v438 = vor.u32 %v434, %v437
      %v439 = vrot.slane %v438, 4
      %v441 = vshll.u32 %v312, 16
      %v443 = vrot.slane %v441, 5
      %v444 = vsel %vm358, %v439, %v443
      %v445 = vshrl.u32 %v312, 16
      %v447 = vrot.slane %v445, 4
      %v448 = vor.u32 %v447, %v443
      %v449 = vrot.slane %v448, 4
      %v451 = vshll.u32 %v313, 16
      %v453 = vrot.slane %v451, 5
      %v454 = vsel %vm358, %v449, %v453
      %v456 = vshrl.u32 %v314, 16
      %v458 = vrot.slane %v456, 4
      %v459 = vshll.u32 %v314, 16
      %v461 = vrot.slane %v459, 5
      %v462 = vor.u32 %v458, %v461
      %v463 = vrot.slane %v462, 4
      %v465 = vshll.u32 %v315, 16
      %v467 = vrot.slane %v465, 5
      %v468 = vsel %vm358, %v463, %v467
      %v469 = vshrl.u32 %v315, 16
      %v471 = vrot.slane %v469, 4
      %v472 = vor.u32 %v471, %v467
      %v473 = vrot.slane %v472, 4
      %v475 = vshll.u32 %v316, 16
      %v477 = vrot.slane %v475, 5
      %v478 = vsel %vm358, %v473, %v477
      %v480 = vshrl.u32 %v317, 16
      %v482 = vrot.slane %v480, 4
      %v483 = vshll.u32 %v317, 16
      %v485 = vrot.slane %v483, 5
      %v486 = vor.u32 %v482, %v485
      %v487 = vrot.slane %v486, 4
      %v489 = vshll.u32 %v318, 16
      %v491 = vrot.slane %v489, 5
      %v492 = vsel %vm358, %v487, %v491
      %v493 = vshrl.u32 %v318, 16
      %v495 = vrot.slane %v493, 4
      %v496 = vor.u32 %v495, %v491
      %v497 = vrot.slane %v496, 4
      %v499 = vshll.u32 %v319, 16
      %v501 = vrot.slane %v499, 5
      %v502 = vsel %vm358, %v497, %v501
      %v504 = vshrl.u32 %v320, 16
      %v506 = vrot.slane %v504, 4
      %v507 = vshll.u32 %v320, 16
      %v509 = vrot.slane %v507, 5
      %v510 = vor.u32 %v506, %v509
      %v511 = vrot.slane %v510, 4
      %v513 = vshll.u32 %v321, 16
      %v515 = vrot.slane %v513, 5
      %v516 = vsel %vm358, %v511, %v515
      %v517 = vshrl.u32 %v321, 16
      %v519 = vrot.slane %v517, 4
      %v520 = vor.u32 %v519, %v515
      %v521 = vrot.slane %v520, 4
      %v523 = vshll.u32 %v322, 16
      %v525 = vrot.slane %v523, 5
      %v526 = vsel %vm358, %v521, %v525
      %v528 = vshrl.u32 %v323, 16
      %v530 = vrot.slane %v528, 4
      %v531 = vshll.u32 %v323, 16
      %v533 = vrot.slane %v531, 5
      %v534 = vor.u32 %v530, %v533
      %v535 = vrot.slane %v534, 4
      %v537 = vshll.u32 %v324, 16
      %v539 = vrot.slane %v537, 5
      %v540 = vsel %vm358, %v535, %v539
      %v541 = vshrl.u32 %v324, 16
      %v543 = vrot.slane %v541, 4
      %v544 = vor.u32 %v543, %v539
      %v545 = vrot.slane %v544, 4
      %v547 = vshll.u32 %v325, 16
      %v549 = vrot.slane %v547, 5
      %v550 = vsel %vm358, %v545, %v549
      %v552 = vshrl.u32 %v326, 16
      %v554 = vrot.slane %v552, 4
      %v555 = vshll.u32 %v326, 16
      %v557 = vrot.slane %v555, 5
      %v558 = vor.u32 %v554, %v557
      %v559 = vrot.slane %v558, 4
      %v561 = vshll.u32 %v327, 16
      %v563 = vrot.slane %v561, 5
      %v564 = vsel %vm358, %v559, %v563
      %v565 = vshrl.u32 %v327, 16
      %v567 = vrot.slane %v565, 4
      %v568 = vor.u32 %v567, %v563
      %v569 = vrot.slane %v568, 4
      %v571 = vshll.u32 %v328, 16
      %v573 = vrot.slane %v571, 5
      %v574 = vsel %vm358, %v569, %v573
      %v576 = vshrl.u32 %v329, 16
      %v578 = vrot.slane %v576, 4
      %v579 = vshll.u32 %v329, 16
      %v581 = vrot.slane %v579, 5
      %v582 = vor.u32 %v578, %v581
      %v583 = vrot.slane %v582, 4
      %v585 = vshll.u32 %v330, 16
      %v587 = vrot.slane %v585, 5
      %v588 = vsel %vm358, %v583, %v587
      %v589 = vshrl.u32 %v330, 16
      %v591 = vrot.slane %v589, 4
      %v592 = vor.u32 %v591, %v587
      %v593 = vrot.slane %v592, 4
      %v595 = vshll.u32 %v331, 16
      %v597 = vrot.slane %v595, 5
      %v598 = vsel %vm358, %v593, %v597
      %v600 = vshrl.u32 %v332, 16
      %v602 = vrot.slane %v600, 4
      %v603 = vshll.u32 %v332, 16
      %v605 = vrot.slane %v603, 5
      %v606 = vor.u32 %v602, %v605
      %v607 = vrot.slane %v606, 4
      %v609 = vshll.u32 %v333, 16
      %v611 = vrot.slane %v609, 5
      %v612 = vsel %vm358, %v607, %v611
      %v613 = vshrl.u32 %v333, 16
      %v615 = vrot.slane %v613, 4
      %v616 = vor.u32 %v615, %v611
      %v617 = vrot.slane %v616, 4
      %v619 = vshll.u32 %v334, 16
      %v621 = vrot.slane %v619, 5
      %v622 = vsel %vm358, %v617, %v621
      %v624 = vshrl.u32 %v335, 16
      %v626 = vrot.slane %v624, 4
      %v627 = vshll.u32 %v335, 16
      %v629 = vrot.slane %v627, 5
      %v630 = vor.u32 %v626, %v629
      %v631 = vrot.slane %v630, 4
      %v633 = vshll.u32 %v336, 16
      %v635 = vrot.slane %v633, 5
      %v636 = vsel %vm358, %v631, %v635
      %v637 = vshrl.u32 %v336, 16
      %v639 = vrot.slane %v637, 4
      %v640 = vor.u32 %v639, %v635
      %v641 = vrot.slane %v640, 4
      %v643 = vshll.u32 %v337, 16
      %v645 = vrot.slane %v643, 5
      %v646 = vsel %vm358, %v641, %v645
      %v648 = vshrl.u32 %v338, 16
      %v650 = vrot.slane %v648, 4
      %v651 = vshll.u32 %v338, 16
      %v653 = vrot.slane %v651, 5
      %v654 = vor.u32 %v650, %v653
      %v655 = vrot.slane %v654, 4
      %v657 = vshll.u32 %v339, 16
      %v659 = vrot.slane %v657, 5
      %v660 = vsel %vm358, %v655, %v659
      %v661 = vshrl.u32 %v339, 16
      %v663 = vrot.slane %v661, 4
      %v664 = vor.u32 %v663, %v659
      %v665 = vrot.slane %v664, 4
      %v667 = vshll.u32 %v340, 16
      %v669 = vrot.slane %v667, 5
      %v670 = vsel %vm358, %v665, %v669
      %v672 = vshrl.u32 %v341, 16
      %v674 = vrot.slane %v672, 4
      %v675 = vshll.u32 %v341, 16
      %v677 = vrot.slane %v675, 5
      %v678 = vor.u32 %v674, %v677
      %v679 = vrot.slane %v678, 4
      %v681 = vshll.u32 %v342, 16
      %v683 = vrot.slane %v681, 5
      %v684 = vsel %vm358, %v679, %v683
      %v685 = vshrl.u32 %v342, 16
      %v687 = vrot.slane %v685, 4
      %v688 = vor.u32 %v687, %v683
      %v689 = vrot.slane %v688, 4
      %v691 = vshll.u32 %v343, 16
      %v693 = vrot.slane %v691, 5
      %v694 = vsel %vm358, %v689, %v693
      %v696 = vshrl.u32 %v344, 16
      %v698 = vrot.slane %v696, 4
      %v699 = vshll.u32 %v344, 16
      %v701 = vrot.slane %v699, 5
      %v702 = vor.u32 %v698, %v701
      %v703 = vrot.slane %v702, 4
      %v705 = vshll.u32 %v345, 16
      %v707 = vrot.slane %v705, 5
      %v708 = vsel %vm358, %v703, %v707
      %v709 = vshrl.u32 %v345, 16
      %v711 = vrot.slane %v709, 4
      %v712 = vor.u32 %v711, %v707
      %v713 = vrot.slane %v712, 4
      %v715 = vshll.u32 %v346, 16
      %v717 = vrot.slane %v715, 5
      %v718 = vsel %vm358, %v713, %v717
      %v720 = vshrl.u32 %v347, 16
      %v722 = vrot.slane %v720, 4
      %v723 = vshll.u32 %v347, 16
      %v725 = vrot.slane %v723, 5
      %v726 = vor.u32 %v722, %v725
      %v727 = vrot.slane %v726, 4
      %v729 = vshll.u32 %v348, 16
      %v731 = vrot.slane %v729, 5
      %v732 = vsel %vm358, %v727, %v731
      %v733 = vshrl.u32 %v348, 16
      %v735 = vrot.slane %v733, 4
      %v736 = vor.u32 %v735, %v731
      %v737 = vrot.slane %v736, 4
      %v739 = vshll.u32 %v349, 16
      %v741 = vrot.slane %v739, 5
      %v742 = vsel %vm358, %v737, %v741
      %vm791 = vcmask 1042432
      %vm792 = vcmask 1046532
      %vm793 = vmor %vm791, %vm792
      %v794 = vrot.slane %v302, 5
      %v795 = vrot.slane %v794, 4
      %v796 = vrot.slane %v303, 5
      %v797 = vsel %vm793, %v795, %v796
      %v798 = vrot.slane %v796, 4
      %v799 = vrot.slane %v304, 5
      %v800 = vsel %vm793, %v798, %v799
      %v801 = vrot.slane %v305, 5
      %v802 = vrot.slane %v801, 4
      %v803 = vrot.slane %v306, 5
      %v804 = vsel %vm793, %v802, %v803
      %v805 = vrot.slane %v803, 4
      %v806 = vrot.slane %v307, 5
      %v807 = vsel %vm793, %v805, %v806
      %v808 = vrot.slane %v308, 5
      %v809 = vrot.slane %v808, 4
      %v810 = vrot.slane %v309, 5
      %v811 = vsel %vm793, %v809, %v810
      %v812 = vrot.slane %v810, 4
      %v813 = vrot.slane %v310, 5
      %v814 = vsel %vm793, %v812, %v813
      %v815 = vrot.slane %v311, 5
      %v816 = vrot.slane %v815, 4
      %v817 = vrot.slane %v312, 5
      %v818 = vsel %vm793, %v816, %v817
      %v819 = vrot.slane %v817, 4
      %v820 = vrot.slane %v313, 5
      %v821 = vsel %vm793, %v819, %v820
      %v822 = vrot.slane %v314, 5
      %v823 = vrot.slane %v822, 4
      %v824 = vrot.slane %v315, 5
      %v825 = vsel %vm793, %v823, %v824
      %v826 = vrot.slane %v824, 4
      %v827 = vrot.slane %v316, 5
      %v828 = vsel %vm793, %v826, %v827
      %v829 = vrot.slane %v317, 5
      %v830 = vrot.slane %v829, 4
      %v831 = vrot.slane %v318, 5
      %v832 = vsel %vm793, %v830, %v831
      %v833 = vrot.slane %v831, 4
      %v834 = vrot.slane %v319, 5
      %v835 = vsel %vm793, %v833, %v834
      %v836 = vrot.slane %v320, 5
      %v837 = vrot.slane %v836, 4
      %v838 = vrot.slane %v321, 5
      %v839 = vsel %vm793, %v837, %v838
      %v840 = vrot.slane %v838, 4
      %v841 = vrot.slane %v322, 5
      %v842 = vsel %vm793, %v840, %v841
      %v843 = vrot.slane %v323, 5
      %v844 = vrot.slane %v843, 4
      %v845 = vrot.slane %v324, 5
      %v846 = vsel %vm793, %v844, %v845
      %v847 = vrot.slane %v845, 4
      %v848 = vrot.slane %v325, 5
      %v849 = vsel %vm793, %v847, %v848
      %v850 = vrot.slane %v326, 5
      %v851 = vrot.slane %v850, 4
      %v852 = vrot.slane %v327, 5
      %v853 = vsel %vm793, %v851, %v852
      %v854 = vrot.slane %v852, 4
      %v855 = vrot.slane %v328, 5
      %v856 = vsel %vm793, %v854, %v855
      %v857 = vrot.slane %v329, 5
      %v858 = vrot.slane %v857, 4
      %v859 = vrot.slane %v330, 5
      %v860 = vsel %vm793, %v858, %v859
      %v861 = vrot.slane %v859, 4
      %v862 = vrot.slane %v331, 5
      %v863 = vsel %vm793, %v861, %v862
      %v864 = vrot.slane %v332, 5
      %v865 = vrot.slane %v864, 4
      %v866 = vrot.slane %v333, 5
      %v867 = vsel %vm793, %v865, %v866
      %v868 = vrot.slane %v866, 4
      %v869 = vrot.slane %v334, 5
      %v870 = vsel %vm793, %v868, %v869
      %v871 = vrot.slane %v335, 5
      %v872 = vrot.slane %v871, 4
      %v873 = vrot.slane %v336, 5
      %v874 = vsel %vm793, %v872, %v873
      %v875 = vrot.slane %v873, 4
      %v876 = vrot.slane %v337, 5
      %v877 = vsel %vm793, %v875, %v876
      %v878 = vrot.slane %v338, 5
      %v879 = vrot.slane %v878, 4
      %v880 = vrot.slane %v339, 5
      %v881 = vsel %vm793, %v879, %v880
      %v882 = vrot.slane %v880, 4
      %v883 = vrot.slane %v340, 5
      %v884 = vsel %vm793, %v882, %v883
      %v885 = vrot.slane %v341, 5
      %v886 = vrot.slane %v885, 4
      %v887 = vrot.slane %v342, 5
      %v888 = vsel %vm793, %v886, %v887
      %v889 = vrot.slane %v887, 4
      %v890 = vrot.slane %v343, 5
      %v891 = vsel %vm793, %v889, %v890
      %v892 = vrot.slane %v344, 5
      %v893 = vrot.slane %v892, 4
      %v894 = vrot.slane %v345, 5
      %v895 = vsel %vm793, %v893, %v894
      %v896 = vrot.slane %v894, 4
      %v897 = vrot.slane %v346, 5
      %v898 = vsel %vm793, %v896, %v897
      %v899 = vrot.slane %v347, 5
      %v900 = vrot.slane %v899, 4
      %v901 = vrot.slane %v348, 5
      %v902 = vsel %vm793, %v900, %v901
      %v903 = vrot.slane %v901, 4
      %v904 = vrot.slane %v349, 5
      %v905 = vsel %vm793, %v903, %v904
      %v907 = vshrl.u32 %v350, 16
      %v909 = vrot.slane %v907, 4
      %v910 = vshll.u32 %v350, 16
      %v912 = vrot.slane %v910, 5
      %v913 = vor.u32 %v909, %v912
      %v914 = vrot.slane %v913, 4
      %v916 = vshll.u32 %v351, 16
      %v918 = vrot.slane %v916, 5
      %v919 = vsel %vm358, %v914, %v918
      %v920 = vshrl.u32 %v351, 16
      %v922 = vrot.slane %v920, 4
      %v923 = vor.u32 %v922, %v918
      %v924 = vrot.slane %v923, 4
      %v926 = vshll.u32 %v352, 16
      %v928 = vrot.slane %v926, 5
      %v929 = vsel %vm358, %v924, %v928
      %v933 = vrot.slane %v350, 5
      %v934 = vrot.slane %v933, 4
      %v935 = vrot.slane %v351, 5
      %v936 = vsel %vm793, %v934, %v935
      %v937 = vrot.slane %v935, 4
      %v938 = vrot.slane %v352, 5
      %v939 = vsel %vm793, %v937, %v938
      %v941 = vshrl.u32 %v353, 16
      %v943 = vrot.slane %v941, 4
      %v944 = vshll.u32 %v353, 16
      %v946 = vrot.slane %v944, 5
      %v947 = vor.u32 %v943, %v946
      %v948 = vrot.slane %v947, 4
      %v950 = vshll.u32 %v354, 16
      %v952 = vrot.slane %v950, 5
      %v953 = vsel %vm358, %v948, %v952
      %v954 = vshrl.u32 %v354, 16
      %v956 = vrot.slane %v954, 4
      %v957 = vor.u32 %v956, %v952
      %v958 = vrot.slane %v957, 4
      %v960 = vshll.u32 %v355, 16
      %v962 = vrot.slane %v960, 5
      %v963 = vsel %vm358, %v958, %v962
      %v967 = vrot.slane %v353, 5
      %v968 = vrot.slane %v967, 4
      %v969 = vrot.slane %v354, 5
      %v970 = vsel %vm793, %v968, %v969
      %v971 = vrot.slane %v969, 4
      %v972 = vrot.slane %v355, 5
      %v973 = vsel %vm793, %v971, %v972
      %v974 = vunpack.c.l.b16 %v302
      %v975 = vunpack.c.l.b16 %v303
      %v976 = vunpack.c.l.b16 %v305
      %v977 = vunpack.c.l.b16 %v306
      %v978 = vunpack.c.l.b16 %v308
      %v979 = vunpack.c.l.b16 %v309
      %v980 = vunpack.c.l.b16 %v311
      %v981 = vunpack.c.l.b16 %v312
      %v982 = vunpack.c.l.b16 %v314
      %v983 = vunpack.c.l.b16 %v315
      %v984 = vunpack.c.l.b16 %v317
      %v985 = vunpack.c.l.b16 %v318
      %v986 = vunpack.c.l.b16 %v320
      %v987 = vunpack.c.l.b16 %v321
      %v988 = vunpack.c.l.b16 %v323
      %v989 = vunpack.c.l.b16 %v324
      %v990 = vunpack.c.l.b16 %v326
      %v991 = vunpack.c.l.b16 %v327
      %v992 = vunpack.c.l.b16 %v329
      %v993 = vunpack.c.l.b16 %v330
      %v994 = vunpack.c.l.b16 %v332
      %v995 = vunpack.c.l.b16 %v333
      %v996 = vunpack.c.l.b16 %v335
      %v997 = vunpack.c.l.b16 %v336
      %v998 = vunpack.c.l.b16 %v338
      %v999 = vunpack.c.l.b16 %v339
      %v1000 = vunpack.c.l.b16 %v341
      %v1001 = vunpack.c.l.b16 %v342
      %v1002 = vunpack.c.l.b16 %v344
      %v1003 = vunpack.c.l.b16 %v345
      %v1004 = vunpack.c.l.b16 %v347
      %v1005 = vunpack.c.l.b16 %v348
      %v1006 = vpack.c.b16 %v975, %v974
      %v1007 = vpack.c.b16 %v977, %v976
      %v1008 = vpack.c.b16 %v979, %v978
      %v1009 = vpack.c.b16 %v981, %v980
      %v1010 = vpack.c.b16 %v983, %v982
      %v1011 = vpack.c.b16 %v985, %v984
      %v1012 = vpack.c.b16 %v987, %v986
      %v1013 = vpack.c.b16 %v989, %v988
      %v1014 = vpack.c.b16 %v991, %v990
      %v1015 = vpack.c.b16 %v993, %v992
      %v1016 = vpack.c.b16 %v995, %v994
      %v1017 = vpack.c.b16 %v997, %v996
      %v1018 = vpack.c.b16 %v999, %v998
      %v1019 = vpack.c.b16 %v1001, %v1000
      %v1020 = vpack.c.b16 %v1003, %v1002
      %v1021 = vpack.c.b16 %v1005, %v1004
      %v1022 = vunpack.c.l.b16 %v372
      %v1023 = vunpack.c.l.b16 %v382
      %v1024 = vunpack.c.l.b16 %v396
      %v1025 = vunpack.c.l.b16 %v406
      %v1026 = vunpack.c.l.b16 %v420
      %v1027 = vunpack.c.l.b16 %v430
      %v1028 = vunpack.c.l.b16 %v444
      %v1029 = vunpack.c.l.b16 %v454
      %v1030 = vunpack.c.l.b16 %v468
      %v1031 = vunpack.c.l.b16 %v478
      %v1032 = vunpack.c.l.b16 %v492
      %v1033 = vunpack.c.l.b16 %v502
      %v1034 = vunpack.c.l.b16 %v516
      %v1035 = vunpack.c.l.b16 %v526
      %v1036 = vunpack.c.l.b16 %v540
      %v1037 = vunpack.c.l.b16 %v550
      %v1038 = vunpack.c.l.b16 %v564
      %v1039 = vunpack.c.l.b16 %v574
      %v1040 = vunpack.c.l.b16 %v588
      %v1041 = vunpack.c.l.b16 %v598
      %v1042 = vunpack.c.l.b16 %v612
      %v1043 = vunpack.c.l.b16 %v622
      %v1044 = vunpack.c.l.b16 %v636
      %v1045 = vunpack.c.l.b16 %v646
      %v1046 = vunpack.c.l.b16 %v660
      %v1047 = vunpack.c.l.b16 %v670
      %v1048 = vunpack.c.l.b16 %v684
      %v1049 = vunpack.c.l.b16 %v694
      %v1050 = vunpack.c.l.b16 %v708
      %v1051 = vunpack.c.l.b16 %v718
      %v1052 = vunpack.c.l.b16 %v732
      %v1053 = vunpack.c.l.b16 %v742
      %v1054 = vpack.c.b16 %v1023, %v1022
      %v1055 = vpack.c.b16 %v1025, %v1024
      %v1056 = vpack.c.b16 %v1027, %v1026
      %v1057 = vpack.c.b16 %v1029, %v1028
      %v1058 = vpack.c.b16 %v1031, %v1030
      %v1059 = vpack.c.b16 %v1033, %v1032
      %v1060 = vpack.c.b16 %v1035, %v1034
      %v1061 = vpack.c.b16 %v1037, %v1036
      %v1062 = vpack.c.b16 %v1039, %v1038
      %v1063 = vpack.c.b16 %v1041, %v1040
      %v1064 = vpack.c.b16 %v1043, %v1042
      %v1065 = vpack.c.b16 %v1045, %v1044
      %v1066 = vpack.c.b16 %v1047, %v1046
      %v1067 = vpack.c.b16 %v1049, %v1048
      %v1068 = vpack.c.b16 %v1051, %v1050
      %v1069 = vpack.c.b16 %v1053, %v1052
      %1070 = vrot.lane.b32.xlu0 %v1054, 4
      %v1071 = vpop.permute.xlu0 %1070
      %1072 = vrot.lane.b32.xlu0 %v1055, 4
      %v1073 = vpop.permute.xlu0 %1072
      %1074 = vrot.lane.b32.xlu0 %v1056, 4
      %v1075 = vpop.permute.xlu0 %1074
      %1076 = vrot.lane.b32.xlu0 %v1057, 4
      %v1077 = vpop.permute.xlu0 %1076
      %1078 = vrot.lane.b32.xlu0 %v1058, 4
      %v1079 = vpop.permute.xlu0 %1078
      %1080 = vrot.lane.b32.xlu0 %v1059, 4
      %v1081 = vpop.permute.xlu0 %1080
      %1082 = vrot.lane.b32.xlu0 %v1060, 4
      %v1083 = vpop.permute.xlu0 %1082
      %1084 = vrot.lane.b32.xlu0 %v1061, 4
      %v1085 = vpop.permute.xlu0 %1084
      %1086 = vrot.lane.b32.xlu0 %v1062, 4
      %v1087 = vpop.permute.xlu0 %1086
      %1088 = vrot.lane.b32.xlu0 %v1063, 4
      %v1089 = vpop.permute.xlu0 %1088
      %1090 = vrot.lane.b32.xlu0 %v1064, 4
      %v1091 = vpop.permute.xlu0 %1090
      %1092 = vrot.lane.b32.xlu0 %v1065, 4
      %v1093 = vpop.permute.xlu0 %1092
      %1094 = vrot.lane.b32.xlu0 %v1066, 4
      %v1095 = vpop.permute.xlu0 %1094
      %1096 = vrot.lane.b32.xlu0 %v1067, 4
      %v1097 = vpop.permute.xlu0 %1096
      %1098 = vrot.lane.b32.xlu0 %v1068, 4
      %v1099 = vpop.permute.xlu0 %1098
      %1100 = vrot.lane.b32.xlu0 %v1069, 4
      %v1101 = vpop.permute.xlu0 %1100
      %v1102 = vunpack.c.l.b16 %v797
      %v1103 = vunpack.c.l.b16 %v800
      %v1104 = vunpack.c.l.b16 %v804
      %v1105 = vunpack.c.l.b16 %v807
      %v1106 = vunpack.c.l.b16 %v811
      %v1107 = vunpack.c.l.b16 %v814
      %v1108 = vunpack.c.l.b16 %v818
      %v1109 = vunpack.c.l.b16 %v821
      %v1110 = vunpack.c.l.b16 %v825
      %v1111 = vunpack.c.l.b16 %v828
      %v1112 = vunpack.c.l.b16 %v832
      %v1113 = vunpack.c.l.b16 %v835
      %v1114 = vunpack.c.l.b16 %v839
      %v1115 = vunpack.c.l.b16 %v842
      %v1116 = vunpack.c.l.b16 %v846
      %v1117 = vunpack.c.l.b16 %v849
      %v1118 = vunpack.c.l.b16 %v853
      %v1119 = vunpack.c.l.b16 %v856
      %v1120 = vunpack.c.l.b16 %v860
      %v1121 = vunpack.c.l.b16 %v863
      %v1122 = vunpack.c.l.b16 %v867
      %v1123 = vunpack.c.l.b16 %v870
      %v1124 = vunpack.c.l.b16 %v874
      %v1125 = vunpack.c.l.b16 %v877
      %v1126 = vunpack.c.l.b16 %v881
      %v1127 = vunpack.c.l.b16 %v884
      %v1128 = vunpack.c.l.b16 %v888
      %v1129 = vunpack.c.l.b16 %v891
      %v1130 = vunpack.c.l.b16 %v895
      %v1131 = vunpack.c.l.b16 %v898
      %v1132 = vunpack.c.l.b16 %v902
      %v1133 = vunpack.c.l.b16 %v905
      %v1134 = vpack.c.b16 %v1103, %v1102
      %v1135 = vpack.c.b16 %v1105, %v1104
      %v1136 = vpack.c.b16 %v1107, %v1106
      %v1137 = vpack.c.b16 %v1109, %v1108
      %v1138 = vpack.c.b16 %v1111, %v1110
      %v1139 = vpack.c.b16 %v1113, %v1112
      %v1140 = vpack.c.b16 %v1115, %v1114
      %v1141 = vpack.c.b16 %v1117, %v1116
      %v1142 = vpack.c.b16 %v1119, %v1118
      %v1143 = vpack.c.b16 %v1121, %v1120
      %v1144 = vpack.c.b16 %v1123, %v1122
      %v1145 = vpack.c.b16 %v1125, %v1124
      %v1146 = vpack.c.b16 %v1127, %v1126
      %v1147 = vpack.c.b16 %v1129, %v1128
      %v1148 = vpack.c.b16 %v1131, %v1130
      %v1149 = vpack.c.b16 %v1133, %v1132
      %1150 = vrot.lane.b32.xlu0 %v1134, 8
      %v1151 = vpop.permute.xlu0 %1150
      %1152 = vrot.lane.b32.xlu0 %v1135, 8
      %v1153 = vpop.permute.xlu0 %1152
      %1154 = vrot.lane.b32.xlu0 %v1136, 8
      %v1155 = vpop.permute.xlu0 %1154
      %1156 = vrot.lane.b32.xlu0 %v1137, 8
      %v1157 = vpop.permute.xlu0 %1156
      %1158 = vrot.lane.b32.xlu0 %v1138, 8
      %v1159 = vpop.permute.xlu0 %1158
      %1160 = vrot.lane.b32.xlu0 %v1139, 8
      %v1161 = vpop.permute.xlu0 %1160
      %1162 = vrot.lane.b32.xlu0 %v1140, 8
      %v1163 = vpop.permute.xlu0 %1162
      %1164 = vrot.lane.b32.xlu0 %v1141, 8
      %v1165 = vpop.permute.xlu0 %1164
      %1166 = vrot.lane.b32.xlu0 %v1142, 8
      %v1167 = vpop.permute.xlu0 %1166
      %1168 = vrot.lane.b32.xlu0 %v1143, 8
      %v1169 = vpop.permute.xlu0 %1168
      %1170 = vrot.lane.b32.xlu0 %v1144, 8
      %v1171 = vpop.permute.xlu0 %1170
      %1172 = vrot.lane.b32.xlu0 %v1145, 8
      %v1173 = vpop.permute.xlu0 %1172
      %1174 = vrot.lane.b32.xlu0 %v1146, 8
      %v1175 = vpop.permute.xlu0 %1174
      %1176 = vrot.lane.b32.xlu0 %v1147, 8
      %v1177 = vpop.permute.xlu0 %1176
      %1178 = vrot.lane.b32.xlu0 %v1148, 8
      %v1179 = vpop.permute.xlu0 %1178
      %1180 = vrot.lane.b32.xlu0 %v1149, 8
      %v1181 = vpop.permute.xlu0 %1180
      %v1182 = vunpack.c.l.b16 %v350
      %v1183 = vunpack.c.l.b16 %v351
      %v1184 = vpack.c.b16 %v1183, %v1182
      %1185 = vrot.lane.b32.xlu0 %v1007, 12
      %v1186 = vpop.permute.xlu0 %1185
      %1187 = vrot.lane.b32.xlu0 %v1008, 12
      %v1188 = vpop.permute.xlu0 %1187
      %1189 = vrot.lane.b32.xlu0 %v1009, 12
      %v1190 = vpop.permute.xlu0 %1189
      %1191 = vrot.lane.b32.xlu0 %v1010, 12
      %v1192 = vpop.permute.xlu0 %1191
      %1193 = vrot.lane.b32.xlu0 %v1011, 12
      %v1194 = vpop.permute.xlu0 %1193
      %1195 = vrot.lane.b32.xlu0 %v1012, 12
      %v1196 = vpop.permute.xlu0 %1195
      %1197 = vrot.lane.b32.xlu0 %v1013, 12
      %v1198 = vpop.permute.xlu0 %1197
      %1199 = vrot.lane.b32.xlu0 %v1014, 12
      %v1200 = vpop.permute.xlu0 %1199
      %1201 = vrot.lane.b32.xlu0 %v1015, 12
      %v1202 = vpop.permute.xlu0 %1201
      %1203 = vrot.lane.b32.xlu0 %v1016, 12
      %v1204 = vpop.permute.xlu0 %1203
      %1205 = vrot.lane.b32.xlu0 %v1017, 12
      %v1206 = vpop.permute.xlu0 %1205
      %1207 = vrot.lane.b32.xlu0 %v1018, 12
      %v1208 = vpop.permute.xlu0 %1207
      %1209 = vrot.lane.b32.xlu0 %v1019, 12
      %v1210 = vpop.permute.xlu0 %1209
      %1211 = vrot.lane.b32.xlu0 %v1020, 12
      %v1212 = vpop.permute.xlu0 %1211
      %1213 = vrot.lane.b32.xlu0 %v1021, 12
      %v1214 = vpop.permute.xlu0 %1213
      %1215 = vrot.lane.b32.xlu0 %v1184, 12
      %v1216 = vpop.permute.xlu0 %1215
      %v1217 = vunpack.c.l.b16 %v919
      %v1218 = vunpack.c.l.b16 %v929
      %v1219 = vpack.c.b16 %v1218, %v1217
      %1220 = vrot.lane.b32.xlu0 %v1055, 16
      %v1221 = vpop.permute.xlu0 %1220
      %1222 = vrot.lane.b32.xlu0 %v1056, 16
      %v1223 = vpop.permute.xlu0 %1222
      %1224 = vrot.lane.b32.xlu0 %v1057, 16
      %v1225 = vpop.permute.xlu0 %1224
      %1226 = vrot.lane.b32.xlu0 %v1058, 16
      %v1227 = vpop.permute.xlu0 %1226
      %1228 = vrot.lane.b32.xlu0 %v1059, 16
      %v1229 = vpop.permute.xlu0 %1228
      %1230 = vrot.lane.b32.xlu0 %v1060, 16
      %v1231 = vpop.permute.xlu0 %1230
      %1232 = vrot.lane.b32.xlu0 %v1061, 16
      %v1233 = vpop.permute.xlu0 %1232
      %1234 = vrot.lane.b32.xlu0 %v1062, 16
      %v1235 = vpop.permute.xlu0 %1234
      %1236 = vrot.lane.b32.xlu0 %v1063, 16
      %v1237 = vpop.permute.xlu0 %1236
      %1238 = vrot.lane.b32.xlu0 %v1064, 16
      %v1239 = vpop.permute.xlu0 %1238
      %1240 = vrot.lane.b32.xlu0 %v1065, 16
      %v1241 = vpop.permute.xlu0 %1240
      %1242 = vrot.lane.b32.xlu0 %v1066, 16
      %v1243 = vpop.permute.xlu0 %1242
      %1244 = vrot.lane.b32.xlu0 %v1067, 16
      %v1245 = vpop.permute.xlu0 %1244
      %1246 = vrot.lane.b32.xlu0 %v1068, 16
      %v1247 = vpop.permute.xlu0 %1246
      %1248 = vrot.lane.b32.xlu0 %v1069, 16
      %v1249 = vpop.permute.xlu0 %1248
      %1250 = vrot.lane.b32.xlu0 %v1219, 16
      %v1251 = vpop.permute.xlu0 %1250
      %v1252 = vunpack.c.l.b16 %v936
      %v1253 = vunpack.c.l.b16 %v939
      %v1254 = vpack.c.b16 %v1253, %v1252
      %1255 = vrot.lane.b32.xlu0 %v1135, 20
      %v1256 = vpop.permute.xlu0 %1255
      %1257 = vrot.lane.b32.xlu0 %v1136, 20
      %v1258 = vpop.permute.xlu0 %1257
      %1259 = vrot.lane.b32.xlu0 %v1137, 20
      %v1260 = vpop.permute.xlu0 %1259
      %1261 = vrot.lane.b32.xlu0 %v1138, 20
      %v1262 = vpop.permute.xlu0 %1261
      %1263 = vrot.lane.b32.xlu0 %v1139, 20
      %v1264 = vpop.permute.xlu0 %1263
      %1265 = vrot.lane.b32.xlu0 %v1140, 20
      %v1266 = vpop.permute.xlu0 %1265
      %1267 = vrot.lane.b32.xlu0 %v1141, 20
      %v1268 = vpop.permute.xlu0 %1267
      %1269 = vrot.lane.b32.xlu0 %v1142, 20
      %v1270 = vpop.permute.xlu0 %1269
      %1271 = vrot.lane.b32.xlu0 %v1143, 20
      %v1272 = vpop.permute.xlu0 %1271
      %1273 = vrot.lane.b32.xlu0 %v1144, 20
      %v1274 = vpop.permute.xlu0 %1273
      %1275 = vrot.lane.b32.xlu0 %v1145, 20
      %v1276 = vpop.permute.xlu0 %1275
      %1277 = vrot.lane.b32.xlu0 %v1146, 20
      %v1278 = vpop.permute.xlu0 %1277
      %1279 = vrot.lane.b32.xlu0 %v1147, 20
      %v1280 = vpop.permute.xlu0 %1279
      %1281 = vrot.lane.b32.xlu0 %v1148, 20
      %v1282 = vpop.permute.xlu0 %1281
      %1283 = vrot.lane.b32.xlu0 %v1149, 20
      %v1284 = vpop.permute.xlu0 %1283
      %1285 = vrot.lane.b32.xlu0 %v1254, 20
      %v1286 = vpop.permute.xlu0 %1285
      %v1287 = vunpack.c.l.b16 %v353
      %v1288 = vunpack.c.l.b16 %v354
      %v1289 = vpack.c.b16 %v1288, %v1287
      %1290 = vrot.lane.b32.xlu0 %v1008, 24
      %v1291 = vpop.permute.xlu0 %1290
      %1292 = vrot.lane.b32.xlu0 %v1009, 24
      %v1293 = vpop.permute.xlu0 %1292
      %1294 = vrot.lane.b32.xlu0 %v1010, 24
      %v1295 = vpop.permute.xlu0 %1294
      %1296 = vrot.lane.b32.xlu0 %v1011, 24
      %v1297 = vpop.permute.xlu0 %1296
      %1298 = vrot.lane.b32.xlu0 %v1012, 24
      %v1299 = vpop.permute.xlu0 %1298
      %1300 = vrot.lane.b32.xlu0 %v1013, 24
      %v1301 = vpop.permute.xlu0 %1300
      %1302 = vrot.lane.b32.xlu0 %v1014, 24
      %v1303 = vpop.permute.xlu0 %1302
      %1304 = vrot.lane.b32.xlu0 %v1015, 24
      %v1305 = vpop.permute.xlu0 %1304
      %1306 = vrot.lane.b32.xlu0 %v1016, 24
      %v1307 = vpop.permute.xlu0 %1306
      %1308 = vrot.lane.b32.xlu0 %v1017, 24
      %v1309 = vpop.permute.xlu0 %1308
      %1310 = vrot.lane.b32.xlu0 %v1018, 24
      %v1311 = vpop.permute.xlu0 %1310
      %1312 = vrot.lane.b32.xlu0 %v1019, 24
      %v1313 = vpop.permute.xlu0 %1312
      %1314 = vrot.lane.b32.xlu0 %v1020, 24
      %v1315 = vpop.permute.xlu0 %1314
      %1316 = vrot.lane.b32.xlu0 %v1021, 24
      %v1317 = vpop.permute.xlu0 %1316
      %1318 = vrot.lane.b32.xlu0 %v1184, 24
      %v1319 = vpop.permute.xlu0 %1318
      %1320 = vrot.lane.b32.xlu0 %v1289, 24
      %v1321 = vpop.permute.xlu0 %1320
      %v1322 = vunpack.c.l.b16 %v953
      %v1323 = vunpack.c.l.b16 %v963
      %v1324 = vpack.c.b16 %v1323, %v1322
      %1325 = vrot.lane.b32.xlu0 %v1056, 28
      %v1326 = vpop.permute.xlu0 %1325
      %1327 = vrot.lane.b32.xlu0 %v1057, 28
      %v1328 = vpop.permute.xlu0 %1327
      %1329 = vrot.lane.b32.xlu0 %v1058, 28
      %v1330 = vpop.permute.xlu0 %1329
      %1331 = vrot.lane.b32.xlu0 %v1059, 28
      %v1332 = vpop.permute.xlu0 %1331
      %1333 = vrot.lane.b32.xlu0 %v1060, 28
      %v1334 = vpop.permute.xlu0 %1333
      %1335 = vrot.lane.b32.xlu0 %v1061, 28
      %v1336 = vpop.permute.xlu0 %1335
      %1337 = vrot.lane.b32.xlu0 %v1062, 28
      %v1338 = vpop.permute.xlu0 %1337
      %1339 = vrot.lane.b32.xlu0 %v1063, 28
      %v1340 = vpop.permute.xlu0 %1339
      %1341 = vrot.lane.b32.xlu0 %v1064, 28
      %v1342 = vpop.permute.xlu0 %1341
      %1343 = vrot.lane.b32.xlu0 %v1065, 28
      %v1344 = vpop.permute.xlu0 %1343
      %1345 = vrot.lane.b32.xlu0 %v1066, 28
      %v1346 = vpop.permute.xlu0 %1345
      %1347 = vrot.lane.b32.xlu0 %v1067, 28
      %v1348 = vpop.permute.xlu0 %1347
      %1349 = vrot.lane.b32.xlu0 %v1068, 28
      %v1350 = vpop.permute.xlu0 %1349
      %1351 = vrot.lane.b32.xlu0 %v1069, 28
      %v1352 = vpop.permute.xlu0 %1351
      %1353 = vrot.lane.b32.xlu0 %v1219, 28
      %v1354 = vpop.permute.xlu0 %1353
      %1355 = vrot.lane.b32.xlu0 %v1324, 28
      %v1356 = vpop.permute.xlu0 %1355
      %v1357 = vunpack.c.l.b16 %v970
      %v1358 = vunpack.c.l.b16 %v973
      %v1359 = vpack.c.b16 %v1358, %v1357
      %1360 = vrot.lane.b32.xlu0 %v1136, 32
      %v1361 = vpop.permute.xlu0 %1360
      %1362 = vrot.lane.b32.xlu0 %v1137, 32
      %v1363 = vpop.permute.xlu0 %1362
      %1364 = vrot.lane.b32.xlu0 %v1138, 32
      %v1365 = vpop.permute.xlu0 %1364
      %1366 = vrot.lane.b32.xlu0 %v1139, 32
      %v1367 = vpop.permute.xlu0 %1366
      %1368 = vrot.lane.b32.xlu0 %v1140, 32
      %v1369 = vpop.permute.xlu0 %1368
      %1370 = vrot.lane.b32.xlu0 %v1141, 32
      %v1371 = vpop.permute.xlu0 %1370
      %1372 = vrot.lane.b32.xlu0 %v1142, 32
      %v1373 = vpop.permute.xlu0 %1372
      %1374 = vrot.lane.b32.xlu0 %v1143, 32
      %v1375 = vpop.permute.xlu0 %1374
      %1376 = vrot.lane.b32.xlu0 %v1144, 32
      %v1377 = vpop.permute.xlu0 %1376
      %1378 = vrot.lane.b32.xlu0 %v1145, 32
      %v1379 = vpop.permute.xlu0 %1378
      %1380 = vrot.lane.b32.xlu0 %v1146, 32
      %v1381 = vpop.permute.xlu0 %1380
      %1382 = vrot.lane.b32.xlu0 %v1147, 32
      %v1383 = vpop.permute.xlu0 %1382
      %1384 = vrot.lane.b32.xlu0 %v1148, 32
      %v1385 = vpop.permute.xlu0 %1384
      %1386 = vrot.lane.b32.xlu0 %v1149, 32
      %v1387 = vpop.permute.xlu0 %1386
      %1388 = vrot.lane.b32.xlu0 %v1254, 32
      %v1389 = vpop.permute.xlu0 %1388
      %1390 = vrot.lane.b32.xlu0 %v1359, 32
      %v1391 = vpop.permute.xlu0 %1390
      %vm1392 = vcmask 31744
      %v1395 = vsel %vm1392, %v1006, %v1071
      %v1398 = vsel %vm1392, %v1007, %v1073
      %v1401 = vsel %vm1392, %v1008, %v1075
      %v1404 = vsel %vm1392, %v1009, %v1077
      %v1407 = vsel %vm1392, %v1010, %v1079
      %v1410 = vsel %vm1392, %v1011, %v1081
      %v1413 = vsel %vm1392, %v1012, %v1083
      %v1416 = vsel %vm1392, %v1013, %v1085
      %v1419 = vsel %vm1392, %v1014, %v1087
      %v1422 = vsel %vm1392, %v1015, %v1089
      %v1425 = vsel %vm1392, %v1016, %v1091
      %v1428 = vsel %vm1392, %v1017, %v1093
      %v1431 = vsel %vm1392, %v1018, %v1095
      %v1434 = vsel %vm1392, %v1019, %v1097
      %v1437 = vsel %vm1392, %v1020, %v1099
      %v1440 = vsel %vm1392, %v1021, %v1101
      %vm1441 = vcmask 64512
      %v1443 = vsel %vm1441, %v1395, %v1151
      %v1445 = vsel %vm1441, %v1398, %v1153
      %v1447 = vsel %vm1441, %v1401, %v1155
      %v1449 = vsel %vm1441, %v1404, %v1157
      %v1451 = vsel %vm1441, %v1407, %v1159
      %v1453 = vsel %vm1441, %v1410, %v1161
      %v1455 = vsel %vm1441, %v1413, %v1163
      %v1457 = vsel %vm1441, %v1416, %v1165
      %v1459 = vsel %vm1441, %v1419, %v1167
      %v1461 = vsel %vm1441, %v1422, %v1169
      %v1463 = vsel %vm1441, %v1425, %v1171
      %v1465 = vsel %vm1441, %v1428, %v1173
      %v1467 = vsel %vm1441, %v1431, %v1175
      %v1469 = vsel %vm1441, %v1434, %v1177
      %v1471 = vsel %vm1441, %v1437, %v1179
      %v1473 = vsel %vm1441, %v1440, %v1181
      %vm1474 = vcmask 97280
      %v1476 = vsel %vm1474, %v1443, %v1186
      %v1478 = vsel %vm1474, %v1445, %v1188
      %v1480 = vsel %vm1474, %v1447, %v1190
      %v1482 = vsel %vm1474, %v1449, %v1192
      %v1484 = vsel %vm1474, %v1451, %v1194
      %v1486 = vsel %vm1474, %v1453, %v1196
      %v1488 = vsel %vm1474, %v1455, %v1198
      %v1490 = vsel %vm1474, %v1457, %v1200
      %v1492 = vsel %vm1474, %v1459, %v1202
      %v1494 = vsel %vm1474, %v1461, %v1204
      %v1496 = vsel %vm1474, %v1463, %v1206
      %v1498 = vsel %vm1474, %v1465, %v1208
      %v1500 = vsel %vm1474, %v1467, %v1210
      %v1502 = vsel %vm1474, %v1469, %v1212
      %v1504 = vsel %vm1474, %v1471, %v1214
      %v1506 = vsel %vm1474, %v1473, %v1216
      %vm1507 = vcmask 130048
      %v1509 = vsel %vm1507, %v1476, %v1221
      %v1511 = vsel %vm1507, %v1478, %v1223
      %v1513 = vsel %vm1507, %v1480, %v1225
      %v1515 = vsel %vm1507, %v1482, %v1227
      %v1517 = vsel %vm1507, %v1484, %v1229
      %v1519 = vsel %vm1507, %v1486, %v1231
      %v1521 = vsel %vm1507, %v1488, %v1233
      %v1523 = vsel %vm1507, %v1490, %v1235
      %v1525 = vsel %vm1507, %v1492, %v1237
      %v1527 = vsel %vm1507, %v1494, %v1239
      %v1529 = vsel %vm1507, %v1496, %v1241
      %v1531 = vsel %vm1507, %v1498, %v1243
      %v1533 = vsel %vm1507, %v1500, %v1245
      %v1535 = vsel %vm1507, %v1502, %v1247
      %v1537 = vsel %vm1507, %v1504, %v1249
      %v1539 = vsel %vm1507, %v1506, %v1251
      %vm1540 = vcmask 162816
      %v1542 = vsel %vm1540, %v1509, %v1256
      %v1544 = vsel %vm1540, %v1511, %v1258
      %v1546 = vsel %vm1540, %v1513, %v1260
      %v1548 = vsel %vm1540, %v1515, %v1262
      %v1550 = vsel %vm1540, %v1517, %v1264
      %v1552 = vsel %vm1540, %v1519, %v1266
      %v1554 = vsel %vm1540, %v1521, %v1268
      %v1556 = vsel %vm1540, %v1523, %v1270
      %v1558 = vsel %vm1540, %v1525, %v1272
      %v1560 = vsel %vm1540, %v1527, %v1274
      %v1562 = vsel %vm1540, %v1529, %v1276
      %v1564 = vsel %vm1540, %v1531, %v1278
      %v1566 = vsel %vm1540, %v1533, %v1280
      %v1568 = vsel %vm1540, %v1535, %v1282
      %v1570 = vsel %vm1540, %v1537, %v1284
      %v1572 = vsel %vm1540, %v1539, %v1286
      %vm1573 = vcmask 195584
      %v1575 = vsel %vm1573, %v1542, %v1291
      %v1577 = vsel %vm1573, %v1544, %v1293
      %v1579 = vsel %vm1573, %v1546, %v1295
      %v1581 = vsel %vm1573, %v1548, %v1297
      %v1583 = vsel %vm1573, %v1550, %v1299
      %v1585 = vsel %vm1573, %v1552, %v1301
      %v1587 = vsel %vm1573, %v1554, %v1303
      %v1589 = vsel %vm1573, %v1556, %v1305
      %v1591 = vsel %vm1573, %v1558, %v1307
      %v1593 = vsel %vm1573, %v1560, %v1309
      %v1595 = vsel %vm1573, %v1562, %v1311
      %v1597 = vsel %vm1573, %v1564, %v1313
      %v1599 = vsel %vm1573, %v1566, %v1315
      %v1601 = vsel %vm1573, %v1568, %v1317
      %v1603 = vsel %vm1573, %v1570, %v1319
      %v1605 = vsel %vm1573, %v1572, %v1321
      %vm1606 = vcmask 228352
      %v1608 = vsel %vm1606, %v1575, %v1326
      %v1610 = vsel %vm1606, %v1577, %v1328
      %v1612 = vsel %vm1606, %v1579, %v1330
      %v1614 = vsel %vm1606, %v1581, %v1332
      %v1616 = vsel %vm1606, %v1583, %v1334
      %v1618 = vsel %vm1606, %v1585, %v1336
      %v1620 = vsel %vm1606, %v1587, %v1338
      %v1622 = vsel %vm1606, %v1589, %v1340
      %v1624 = vsel %vm1606, %v1591, %v1342
      %v1626 = vsel %vm1606, %v1593, %v1344
      %v1628 = vsel %vm1606, %v1595, %v1346
      %v1630 = vsel %vm1606, %v1597, %v1348
      %v1632 = vsel %vm1606, %v1599, %v1350
      %v1634 = vsel %vm1606, %v1601, %v1352
      %v1636 = vsel %vm1606, %v1603, %v1354
      %v1638 = vsel %vm1606, %v1605, %v1356
      %vm1639 = vcmask 261120
      %v1641 = vsel %vm1639, %v1608, %v1361
      %v1643 = vsel %vm1639, %v1610, %v1363
      %v1645 = vsel %vm1639, %v1612, %v1365
      %v1647 = vsel %vm1639, %v1614, %v1367
      %v1649 = vsel %vm1639, %v1616, %v1369
      %v1651 = vsel %vm1639, %v1618, %v1371
      %v1653 = vsel %vm1639, %v1620, %v1373
      %v1655 = vsel %vm1639, %v1622, %v1375
      %v1657 = vsel %vm1639, %v1624, %v1377
      %v1659 = vsel %vm1639, %v1626, %v1379
      %v1661 = vsel %vm1639, %v1628, %v1381
      %v1663 = vsel %vm1639, %v1630, %v1383
      %v1665 = vsel %vm1639, %v1632, %v1385
      %v1667 = vsel %vm1639, %v1634, %v1387
      %v1669 = vsel %vm1639, %v1636, %v1389
      %v1671 = vsel %vm1639, %v1638, %v1391
      %v1672 = vld [vmem:[%s2] sm:$0xf]
      %v1673 = vld [vmem:[%s2 + $0x4] sm:$0xf]
      %v1674 = vld [vmem:[%s2 + $0x8] sm:$0xf]
      %v1675 = vld [vmem:[%s2 + $0xc] sm:$0xf]
      %v1676 = vld [vmem:[%s2 + $0x10] sm:$0x3]
      %v1677 = vld [vmem:[%s3] sm:$0x1]
      %v1679 = vlaneseq
      %v1680 = vshrl.u32 %v1679, 7
      %v1681 = vsub.s32 0, %v1680
      %v1682 = vrot.slane %v1677, %v1681
      %v1689 = vunpack.c.l.b16 %v1672
      %v1690 = vunpack.c.l.b16 %v1673
      %v1691 = vunpack.c.l.b16 %v1674
      %v1692 = vunpack.c.l.b16 %v1675
      %v1693 = vunpack.c.l.b16 %v1676
      %v1694 = vpack.c.b16 %v1690, %v1689
      %v1695 = vpack.c.b16 %v1692, %v1691
      %v1696 = vpack.c.b16 %v1693, %v1693
      %vm1699 = vcmask 293888
      %v1700 = vsel %vm1699, %v1641, 0
      %v1702 = vsel %vm1699, %v1643, 0
      %v1704 = vsel %vm1699, %v1645, 0
      %v1706 = vsel %vm1699, %v1647, 0
      %v1708 = vsel %vm1699, %v1649, 0
      %v1710 = vsel %vm1699, %v1651, 0
      %v1712 = vsel %vm1699, %v1653, 0
      %v1714 = vsel %vm1699, %v1655, 0
      %v1716 = vsel %vm1699, %v1657, 0
      %v1718 = vsel %vm1699, %v1659, 0
      %v1720 = vsel %vm1699, %v1661, 0
      %v1722 = vsel %vm1699, %v1663, 0
      %v1724 = vsel %vm1699, %v1665, 0
      %v1726 = vsel %vm1699, %v1667, 0
      %v1728 = vsel %vm1699, %v1669, 0
      %v1730 = vsel %vm1699, %v1671, 0
      %vm1732 = vcmask 1041408
      %v1734 = vsel %vm1732, %v1696, 0
      %1736 = vmatprep.subr.bf16.mxu0 0
      %1737 = vmatpush1.bf16.msra.mxu0 %v1694
      %1738 = vmatprep.subr.bf16.mxu0 0
      %1739 = vmatpush1.bf16.msra.mxu0 %v1695
      %1740 = vmatprep.subr.bf16.mxu0 0
      %1741 = vmatpush1.bf16.msra.mxu0 %v1734
      %1742 = vmatprep.subr.bf16.mxu0 0
      %1743 = vmatpush1.bf16.msra.mxu0 0
      %1744 = vmatprep.subr.bf16.mxu0 0
      %1745 = vmatpush1.bf16.msra.mxu0 0
      %1746 = vmatprep.subr.bf16.mxu0 0
      %1747 = vmatpush1.bf16.msra.mxu0 0
      %1748 = vmatprep.subr.bf16.mxu0 0
      %1749 = vmatpush1.bf16.msra.mxu0 0
      %1750 = vmatprep.subr.bf16.mxu0 0
      %1751 = vmatpush1.bf16.msra.mxu0 0
      %1752 = vmatprep.subr.bf16.mxu0 0
      %1753 = vmatpush1.bf16.msra.mxu0 0
      %1754 = vmatprep.subr.bf16.mxu0 0
      %1755 = vmatpush1.bf16.msra.mxu0 0
      %1756 = vmatprep.subr.bf16.mxu0 0
      %1757 = vmatpush1.bf16.msra.mxu0 0
      %1758 = vmatprep.subr.bf16.mxu0 0
      %1759 = vmatpush1.bf16.msra.mxu0 0
      %1760 = vmatprep.subr.bf16.mxu0 0
      %1761 = vmatpush1.bf16.msra.mxu0 0
      %1762 = vmatprep.subr.bf16.mxu0 0
      %1763 = vmatpush1.bf16.msra.mxu0 0
      %1764 = vmatprep.subr.bf16.mxu0 0
      %1765 = vmatpush1.bf16.msra.mxu0 0
      %1766 = vmatprep.subr.bf16.mxu0 0
      %1767 = vmatpush1.bf16.msra.mxu0 0
      %1768 = vmatprep.mubr.bf16.mxu0 0
      %1769 = vmatmul.mubr.bf16.gmra.mrb[0].mxu0 %v1700
      %v1770 = vpop.f32.mrb[0].mxu0
      %v1771 = vadd.f32 %v1682, %v1770
      %v1772 = vpop.f32.mrb[0].mxu0
      %v1773 = vpop.f32.mrb[0].mxu0
      %v1774 = vadd.f32 %v1682, %v1773
      %v1775 = vpop.f32.mrb[0].mxu0
      %1776 = vmatprep.mubr.bf16.mxu0 0
      %1777 = vmatmul.mubr.bf16.gmra.mrb[0].mxu0 %v1702
      %v1778 = vpop.f32.mrb[0].mxu0
      %v1779 = vadd.f32 %v1682, %v1778
      %v1780 = vpop.f32.mrb[0].mxu0
      %v1781 = vpop.f32.mrb[0].mxu0
      %v1782 = vadd.f32 %v1682, %v1781
      %v1783 = vpop.f32.mrb[0].mxu0
      %1784 = vmatprep.mubr.bf16.mxu0 0
      %1785 = vmatmul.mubr.bf16.gmra.mrb[0].mxu0 %v1704
      %v1786 = vpop.f32.mrb[0].mxu0
      %v1787 = vadd.f32 %v1682, %v1786
      %v1788 = vpop.f32.mrb[0].mxu0
      %v1789 = vpop.f32.mrb[0].mxu0
      %v1790 = vadd.f32 %v1682, %v1789
      %v1791 = vpop.f32.mrb[0].mxu0
      %1792 = vmatprep.mubr.bf16.mxu0 0
      %1793 = vmatmul.mubr.bf16.gmra.mrb[0].mxu0 %v1706
      %v1794 = vpop.f32.mrb[0].mxu0
      %v1795 = vadd.f32 %v1682, %v1794
      %v1796 = vpop.f32.mrb[0].mxu0
      %v1797 = vpop.f32.mrb[0].mxu0
      %v1798 = vadd.f32 %v1682, %v1797
      %v1799 = vpop.f32.mrb[0].mxu0
      %1800 = vmatprep.mubr.bf16.mxu0 0
      %1801 = vmatmul.mubr.bf16.gmra.mrb[0].mxu0 %v1708
      %v1802 = vpop.f32.mrb[0].mxu0
      %v1803 = vadd.f32 %v1682, %v1802
      %v1804 = vpop.f32.mrb[0].mxu0
      %v1805 = vpop.f32.mrb[0].mxu0
      %v1806 = vadd.f32 %v1682, %v1805
      %v1807 = vpop.f32.mrb[0].mxu0
      %1808 = vmatprep.mubr.bf16.mxu0 0
      %1809 = vmatmul.mubr.bf16.gmra.mrb[0].mxu0 %v1710
      %v1810 = vpop.f32.mrb[0].mxu0
      %v1811 = vadd.f32 %v1682, %v1810
      %v1812 = vpop.f32.mrb[0].mxu0
      %v1813 = vpop.f32.mrb[0].mxu0
      %v1814 = vadd.f32 %v1682, %v1813
      %v1815 = vpop.f32.mrb[0].mxu0
      %1816 = vmatprep.mubr.bf16.mxu0 0
      %1817 = vmatmul.mubr.bf16.gmra.mrb[0].mxu0 %v1712
      %v1818 = vpop.f32.mrb[0].mxu0
      %v1819 = vadd.f32 %v1682, %v1818
      %v1820 = vpop.f32.mrb[0].mxu0
      %v1821 = vpop.f32.mrb[0].mxu0
      %v1822 = vadd.f32 %v1682, %v1821
      %v1823 = vpop.f32.mrb[0].mxu0
      %1824 = vmatprep.mubr.bf16.mxu0 0
      %1825 = vmatmul.mubr.bf16.gmra.mrb[0].mxu0 %v1714
      %v1826 = vpop.f32.mrb[0].mxu0
      %v1827 = vadd.f32 %v1682, %v1826
      %v1828 = vpop.f32.mrb[0].mxu0
      %v1829 = vpop.f32.mrb[0].mxu0
      %v1830 = vadd.f32 %v1682, %v1829
      %v1831 = vpop.f32.mrb[0].mxu0
      %1832 = vmatprep.mubr.bf16.mxu0 0
      %1833 = vmatmul.mubr.bf16.gmra.mrb[0].mxu0 %v1716
      %v1834 = vpop.f32.mrb[0].mxu0
      %v1835 = vadd.f32 %v1682, %v1834
      %v1836 = vpop.f32.mrb[0].mxu0
      %v1837 = vpop.f32.mrb[0].mxu0
      %v1838 = vadd.f32 %v1682, %v1837
      %v1839 = vpop.f32.mrb[0].mxu0
      %1840 = vmatprep.mubr.bf16.mxu0 0
      %1841 = vmatmul.mubr.bf16.gmra.mrb[0].mxu0 %v1718
      %v1842 = vpop.f32.mrb[0].mxu0
      %v1843 = vadd.f32 %v1682, %v1842
      %v1844 = vpop.f32.mrb[0].mxu0
      %v1845 = vpop.f32.mrb[0].mxu0
      %v1846 = vadd.f32 %v1682, %v1845
      %v1847 = vpop.f32.mrb[0].mxu0
      %1848 = vmatprep.mubr.bf16.mxu0 0
      %1849 = vmatmul.mubr.bf16.gmra.mrb[0].mxu0 %v1720
      %v1850 = vpop.f32.mrb[0].mxu0
      %v1851 = vadd.f32 %v1682, %v1850
      %v1852 = vpop.f32.mrb[0].mxu0
      %v1853 = vpop.f32.mrb[0].mxu0
      %v1854 = vadd.f32 %v1682, %v1853
      %v1855 = vpop.f32.mrb[0].mxu0
      %1856 = vmatprep.mubr.bf16.mxu0 0
      %1857 = vmatmul.mubr.bf16.gmra.mrb[0].mxu0 %v1722
      %v1858 = vpop.f32.mrb[0].mxu0
      %v1859 = vadd.f32 %v1682, %v1858
      %v1860 = vpop.f32.mrb[0].mxu0
      %v1861 = vpop.f32.mrb[0].mxu0
      %v1862 = vadd.f32 %v1682, %v1861
      %v1863 = vpop.f32.mrb[0].mxu0
      %1864 = vmatprep.mubr.bf16.mxu0 0
      %1865 = vmatmul.mubr.bf16.gmra.mrb[0].mxu0 %v1724
      %v1866 = vpop.f32.mrb[0].mxu0
      %v1867 = vadd.f32 %v1682, %v1866
      %v1868 = vpop.f32.mrb[0].mxu0
      %v1869 = vpop.f32.mrb[0].mxu0
      %v1870 = vadd.f32 %v1682, %v1869
      %v1871 = vpop.f32.mrb[0].mxu0
      %1872 = vmatprep.mubr.bf16.mxu0 0
      %1873 = vmatmul.mubr.bf16.gmra.mrb[0].mxu0 %v1726
      %v1874 = vpop.f32.mrb[0].mxu0
      %v1875 = vadd.f32 %v1682, %v1874
      %v1876 = vpop.f32.mrb[0].mxu0
      %v1877 = vpop.f32.mrb[0].mxu0
      %v1878 = vadd.f32 %v1682, %v1877
      %v1879 = vpop.f32.mrb[0].mxu0
      %1880 = vmatprep.mubr.bf16.mxu0 0
      %1881 = vmatmul.mubr.bf16.gmra.mrb[0].mxu0 %v1728
      %v1882 = vpop.f32.mrb[0].mxu0
      %v1883 = vadd.f32 %v1682, %v1882
      %v1884 = vpop.f32.mrb[0].mxu0
      %v1885 = vpop.f32.mrb[0].mxu0
      %v1886 = vadd.f32 %v1682, %v1885
      %v1887 = vpop.f32.mrb[0].mxu0
      %1888 = vmatprep.mubr.bf16.mxu0 0
      %1889 = vmatmul.mubr.bf16.gmra.mrb[0].mxu0 %v1730
      %v1890 = vpop.f32.mrb[0].mxu0
      %v1891 = vadd.f32 %v1682, %v1890
      %v1892 = vpop.f32.mrb[0].mxu0
      %v1893 = vpop.f32.mrb[0].mxu0
      %v1894 = vadd.f32 %v1682, %v1893
      %v1895 = vpop.f32.mrb[0].mxu0
      %1896 = vdwg.mxu0
      %v1897 = vmax.f32 %v1771, 0.0
      %v1898 = vmax.f32 %v1774, 0.0
      %v1899 = vmax.f32 %v1779, 0.0
      %v1900 = vmax.f32 %v1782, 0.0
      %v1901 = vmax.f32 %v1787, 0.0
      %v1902 = vmax.f32 %v1790, 0.0
      %v1903 = vmax.f32 %v1795, 0.0
      %v1904 = vmax.f32 %v1798, 0.0
      %v1905 = vmax.f32 %v1803, 0.0
      %v1906 = vmax.f32 %v1806, 0.0
      %v1907 = vmax.f32 %v1811, 0.0
      %v1908 = vmax.f32 %v1814, 0.0
      %v1909 = vmax.f32 %v1819, 0.0
      %v1910 = vmax.f32 %v1822, 0.0
      %v1911 = vmax.f32 %v1827, 0.0
      %v1912 = vmax.f32 %v1830, 0.0
      %v1913 = vmax.f32 %v1835, 0.0
      %v1914 = vmax.f32 %v1838, 0.0
      %v1915 = vmax.f32 %v1843, 0.0
      %v1916 = vmax.f32 %v1846, 0.0
      %v1917 = vmax.f32 %v1851, 0.0
      %v1918 = vmax.f32 %v1854, 0.0
      %v1919 = vmax.f32 %v1859, 0.0
      %v1920 = vmax.f32 %v1862, 0.0
      %v1921 = vmax.f32 %v1867, 0.0
      %v1922 = vmax.f32 %v1870, 0.0
      %v1923 = vmax.f32 %v1875, 0.0
      %v1924 = vmax.f32 %v1878, 0.0
      %v1925 = vmax.f32 %v1883, 0.0
      %v1926 = vmax.f32 %v1886, 0.0
      %v1927 = vmax.f32 %v1891, 0.0
      %v1928 = vmax.f32 %v1894, 0.0
      %1929 = vst.msk [vmem:[%s299] sm:$0xff] %vm1441, %v1897
      %1930 = vst.msk [vmem:[%s299 + $0x8] sm:$0xff] %vm1441, %v1898
      %1931 = vst.msk [vmem:[%s299 + $0x10] sm:$0xff] %vm1441, %v1899
      %1932 = vst.msk [vmem:[%s299 + $0x18] sm:$0xff] %vm1441, %v1900
      %1933 = vst.msk [vmem:[%s299 + $0x20] sm:$0xff] %vm1441, %v1901
      %1934 = vst.msk [vmem:[%s299 + $0x28] sm:$0xff] %vm1441, %v1902
      %1935 = vst.msk [vmem:[%s299 + $0x30] sm:$0xff] %vm1441, %v1903
      %1936 = vst.msk [vmem:[%s299 + $0x38] sm:$0xff] %vm1441, %v1904
      %1937 = vst.msk [vmem:[%s299 + $0x40] sm:$0xff] %vm1441, %v1905
      %1938 = vst.msk [vmem:[%s299 + $0x48] sm:$0xff] %vm1441, %v1906
      %1939 = vst.msk [vmem:[%s299 + $0x50] sm:$0xff] %vm1441, %v1907
      %1940 = vst.msk [vmem:[%s299 + $0x58] sm:$0xff] %vm1441, %v1908
      %1941 = vst.msk [vmem:[%s299 + $0x60] sm:$0xff] %vm1441, %v1909
      %1942 = vst.msk [vmem:[%s299 + $0x68] sm:$0xff] %vm1441, %v1910
      %1943 = vst.msk [vmem:[%s299 + $0x70] sm:$0xff] %vm1441, %v1911
      %1944 = vst.msk [vmem:[%s299 + $0x78] sm:$0xff] %vm1441, %v1912
      %1945 = vst.msk [vmem:[%s299 + $0x80] sm:$0xff] %vm1441, %v1913
      %1946 = vst.msk [vmem:[%s299 + $0x88] sm:$0xff] %vm1441, %v1914
      %1947 = vst.msk [vmem:[%s299 + $0x90] sm:$0xff] %vm1441, %v1915
      %1948 = vst.msk [vmem:[%s299 + $0x98] sm:$0xff] %vm1441, %v1916
      %1949 = vst.msk [vmem:[%s299 + $0xa0] sm:$0xff] %vm1441, %v1917
      %1950 = vst.msk [vmem:[%s299 + $0xa8] sm:$0xff] %vm1441, %v1918
      %1951 = vst.msk [vmem:[%s299 + $0xb0] sm:$0xff] %vm1441, %v1919
      %1952 = vst.msk [vmem:[%s299 + $0xb8] sm:$0xff] %vm1441, %v1920
      %1953 = vst.msk [vmem:[%s299 + $0xc0] sm:$0xff] %vm1441, %v1921
      %1954 = vst.msk [vmem:[%s299 + $0xc8] sm:$0xff] %vm1441, %v1922
      %1955 = vst.msk [vmem:[%s299 + $0xd0] sm:$0xff] %vm1441, %v1923
      %1956 = vst.msk [vmem:[%s299 + $0xd8] sm:$0xff] %vm1441, %v1924
      %1957 = vst.msk [vmem:[%s299 + $0xe0] sm:$0xff] %vm1441, %v1925
      %1958 = vst.msk [vmem:[%s299 + $0xe8] sm:$0xff] %vm1441, %v1926
      %1959 = vst.msk [vmem:[%s299 + $0xf0] sm:$0xff] %vm1441, %v1927
      %1960 = vst.msk [vmem:[%s299 + $0xf8] sm:$0xff] %vm1441, %v1928
      %s1961 = smul.u32 16, %s20
      %p1962 = scmp.lt.s32.totalorder %s19, 1
      %s1963 = scalar_select %p1962, %s19, 1
      %p1964 = scmp.lt.s32.totalorder %s1961, 15
      %s1965 = scalar_select %p1964, %s1961, 15
      %s1966 = smul.addr %s1965, 2
      %s1967 = smul.addr %s1963, 32
      %s1968 = sadd.s32 %s1966, %s1967
      %s1969 = smul.addr %s1968, 8
      %s1970 = scalar_lea.vmem %s4, %s1969
      // Predicated region
      $region37: #{tpu_custom_call.1} parent=35 // pred_check
        %p1971 = pneg %p145
      $region38: #{tpu_custom_call.1} parent=35 // pred_check_branch
        %1973 = sbr.rel (%p1971) target = $region40
      $region39: #{tpu_custom_call.1} parent=35 // pred_region
        %s1974 = smul.u32 16, %s20
      $region40: #{tpu_custom_call.1} parent=35 // pred_fallthru
        _
    $region36: #{tpu_custom_call.1} parent=5 // pred_fallthru
      _
    %p1975 = scmp.le.s32.totalorder 2, %s10
    // Predicated region
    $region41: #{tpu_custom_call.1} parent=5 // pred_check
      %p1976 = pneg %p1975
    $region42: #{tpu_custom_call.1} parent=5 // pred_check_branch
      %1978 = sbr.rel (%p1976) target = $region44
    $region43: #{tpu_custom_call.1} parent=5 // pred_region
      %s1979 = ssub.s32 %s10, 2
      // Predicated region
      $region45: #{tpu_custom_call.1} parent=43 // pred_check
        %p1980 = pneg %p151
      $region46: #{tpu_custom_call.1} parent=43 // pred_check_branch
        %1982 = sbr.rel (%p1980) target = $region48
      $region47: #{tpu_custom_call.1} parent=43 // pred_region
        %s1983 = smul.u32 16, %s22
        %p1984 = scmp.lt.s32.totalorder %s21, 1
        %s1985 = scalar_select %p1984, %s21, 1
        %p1986 = scmp.lt.s32.totalorder %s1983, 15
        %s1987 = scalar_select %p1986, %s1983, 15
        %s1988 = smul.addr %s1987, 2
        %s1989 = smul.addr %s1985, 32
        %s1990 = sadd.s32 %s1988, %s1989
        %s1991 = smul.addr %s1990, 8
        %s1992 = scalar_lea.vmem %s4, %s1991
      $region48: #{tpu_custom_call.1} parent=43 // pred_fallthru
        _
    $region44: #{tpu_custom_call.1} parent=5 // pred_fallthru
      _
  $region6: #{tpu_custom_call.1} parent=0 // loop_footer
    %s14 = sadd.s32 1, %s10
  $region7: #{tpu_custom_call.1} parent=0 // loop_footer_branch
    %9 = sbr.rel target = $region3
  $region8: #{tpu_custom_call.1} parent=0 // loop_exit
    _

</llo_original>
